<compile_context>
chip_gen: v6e
topology: v6e:2x2x1
jax: 0.10.0
libtpu: 0.0.40
codegen_flags: <defaults>
</compile_context>

<pallas_src>
import functools

import jax
import jax.numpy as jnp
from jax import lax
from jax.experimental import pallas as pl
from jax.experimental.pallas import tpu as pltpu


def _live_taps(layer, T):
    """(kt, kf) taps of layer `layer` whose dilated time shift stays inside the frame
    range.  Taps with dt >= T only ever see causal padding and are dropped from the
    fused contraction entirely."""
    d = 2 ** layer
    return [(kt, kf) for kt in range(3) for kf in range(3) if (2 - kt) * d < T]


# ----------------------------------------------------------------------------
# Fused Pallas kernel: all dilated dense layers for one batch element.
#   Per layer: causal dilated 3x3 conv (taps staged along K with roll+mask, ONE
#   MXU dot, f32 accumulation) + InstanceNorm2d(affine=False) + PReLU; the dense
#   channel concat is realized as row blocks of the VMEM skip scratch buffer.
# ----------------------------------------------------------------------------
def _dense_block_kernel(x_ref, w_ref, a_ref, m_ref, o_ref, skip_ref, stage_ref,
                        *, depth, T, F):
    # x_ref    : (1, C, N)          input block, N = T*F (lane-dense)
    # w_ref    : (depth, C, Kmax)   per-layer K-fused weights (bf16 or f32)
    # a_ref    : (depth, C, 1)      PReLU slopes (f32)
    # m_ref    : (depth*9, N)       combined causal masks (t>=dt AND f>=df), f32
    # o_ref    : (1, C, N)          last-layer output
    # skip_ref : (depth*C, N) VMEM  dense skip slab, f32
    # stage_ref: (Kstage, N)  VMEM  K-fused shifted-tap staging slab, f32
    Cmax, N = skip_ref.shape
    C = o_ref.shape[1]
    inv_n = 1.0 / N

    # Dense concat as row blocks: the network input sits in the LAST C rows and every
    # layer output is prepended just in front of the live block, so rows
    # [(depth-1-i)*C : Cmax) == concat([out_{i-1}, ..., out_0, x]).  Only live rows are
    # ever read, so no zero-fill of the slab is needed.
    skip_ref[Cmax - C:Cmax, :] = x_ref[0]

    for i in range(depth):                      # static unroll over layers
        d = 2 ** i                              # time dilation of layer i
        base = (depth - 1 - i) * C
        Lc = Cmax - base                        # live input channels = (i+1)*C
        xs = skip_ref[base:Cmax, :]             # (Lc, N) live skip rows, f32

        # Stage the causal (dilated-time, freq) taps along the contraction dim.
        taps = _live_taps(i, T)
        for j, (kt, kf) in enumerate(taps):
            dt = (2 - kt) * d                   # causal time shift of this tap
            df = 2 - kf                         # causal freq shift of this tap
            s = dt * F + df                     # shift in flattened (t, f) lanes
            rows = slice(j * Lc, (j + 1) * Lc)
            if s == 0:
                stage_ref[rows, :] = xs         # centre tap: no shift, no mask
            else:
                idx = i * 9 + kt * 3 + kf
                m = m_ref[idx:idx + 1, :]       # (1, N) combined causal mask
                # tap[:, n] = xs[:, n - s] where (t>=dt AND f>=df), else 0
                # (the mask also kills the wrap-around lanes of the rotate).
                stage_ref[rows, :] = pltpu.roll(xs, shift=s, axis=1) * m

        # One MXU dot per layer (K-fused over taps); bf16/f32 operands, f32 acc.
        K = len(taps) * Lc
        acc = jnp.dot(w_ref[i, :, 0:K],
                      stage_ref[0:K, :].astype(w_ref.dtype),
                      preferred_element_type=jnp.float32)

        # InstanceNorm2d(affine=False, eps=1e-5, biased variance) over T*F.
        # Single pass: two independent cross-lane reductions, then the rsqrt chain.
        # (Conv bias omitted entirely: the mean subtraction removes it exactly.)
        ssum = jnp.sum(acc, axis=1, keepdims=True)
        ssq = jnp.sum(acc * acc, axis=1, keepdims=True)
        mean = ssum * inv_n
        var = jnp.maximum(ssq * inv_n - mean * mean, 0.0)
        yn = (acc - mean) * lax.rsqrt(var + 1e-5)

        # PReLU with per-channel slope.
        out = jnp.where(yn > 0, yn, a_ref[i] * yn)

        if i < depth - 1:
            skip_ref[base - C:base, :] = out    # prepend to the dense skip slab
        else:
            o_ref[0] = out.astype(o_ref.dtype)


def densenet_pallas(x, w_packed, alphas, tap_masks, *, depth):
    """Fused Pallas forward of the causal dilated DenseNet block (causal=(True, True)).

    Single pallas_call per forward; grid=(B,) is batch-parallel.
    """
    # TODO(synk): for production AEC shapes (T*F in the tens of thousands), add a
    # T-tiled grid axis with a 2*2**(depth-1)-frame halo and two-pass InstanceNorm
    # stats, size the tile for v7x's 64 MiB VMEM (16 MiB default scoped on v5e,
    # set vmem_limit_bytes explicitly), and consider pltpu.CORE_PARALLEL on the
    # batch axis so both v7x TensorCores are guaranteed busy.
    B, C, T, Fd = x.shape
    N = T * Fd
    Cmax = depth * C
    stage_rows = max(len(_live_taps(i, T)) * (i + 1) * C for i in range(depth))
    kernel = functools.partial(_dense_block_kernel, depth=depth, T=T, F=Fd)
    out = pl.pallas_call(
        kernel,
        out_shape=jax.ShapeDtypeStruct((B, C, N), jnp.float32),
        grid=(B,),
        in_specs=[
            pl.BlockSpec((1, C, N), lambda b: (b, 0, 0)),
            pl.BlockSpec(w_packed.shape, lambda b: (0, 0, 0)),
            pl.BlockSpec(alphas.shape, lambda b: (0, 0, 0)),
            pl.BlockSpec(tap_masks.shape, lambda b: (0, 0)),
        ],
        out_specs=pl.BlockSpec((1, C, N), lambda b: (b, 0, 0)),
        scratch_shapes=[
            pltpu.VMEM((Cmax, N), jnp.float32),        # dense skip slab
            pltpu.VMEM((stage_rows, N), jnp.float32),  # K-fused tap staging
        ],
        compiler_params=pltpu.CompilerParams(
            dimension_semantics=("parallel",)),
    )(x.reshape(B, C, N), w_packed, alphas, tap_masks)
    return out.reshape(B, C, T, Fd)


# ----------------------------------------------------------------------------
# One-time parameter / mask packing (hoisted out of the forward pass).
# ----------------------------------------------------------------------------
def prepare_params(params, depth, C, T, dtype=jnp.bfloat16):
    """Pack layer-i weight (C, (i+1)*C, 3, 3) into one K-fused (C, K_i) matrix.

    Column block j*Lc:(j+1)*Lc of layer i is live tap j (ordering of _live_taps)
    applied to the live skip rows; dead taps (dt >= T) are dropped.  The conv bias is
    omitted: InstanceNorm2d(affine=False) makes it a mathematical no-op.  Weights are
    stored in `dtype` (bf16 by default) so the MXU sees native bf16 operands.
    """
    Ks = [len(_live_taps(i, T)) * (i + 1) * C for i in range(depth)]
    Kmax = max(Ks)
    w_packed = jnp.zeros((depth, C, Kmax), dtype)
    alphas = []
    for i, (w, _b, a) in enumerate(params):
        cols = jnp.concatenate([w[:, :, kt, kf] for kt, kf in _live_taps(i, T)],
                               axis=1)                     # (C, K_i)
        w_packed = w_packed.at[i, :, :Ks[i]].set(cols.astype(dtype))
        alphas.append(a.reshape(C, 1))
    return w_packed, jnp.stack(alphas, axis=0)


def make_tap_masks(depth, T, F):
    """Combined causal masks: one (T*F,) row per (layer, kt, kf); 1 where the tap
    source (t-dt, f-df) is in range, 0 where it falls into causal padding (this also
    kills the wrap-around lanes produced by pltpu.roll)."""
    t_idx = jnp.arange(T * F, dtype=jnp.int32) // F
    f_idx = jnp.arange(T * F, dtype=jnp.int32) % F
    rows = []
    for i in range(depth):
        d = 2 ** i
        for kt in range(3):
            for kf in range(3):
                dt, df = (2 - kt) * d, (2 - kf)
                rows.append(((t_idx >= dt) & (f_idx >= df)).astype(jnp.float32))
    return jnp.stack(rows, axis=0)                         # (depth*9, T*F)


# ----------------------------------------------------------------------------
# Pure-JAX reference (mirrors the PyTorch DenseNet.forward exactly).
# ----------------------------------------------------------------------------
def densenet_ref(x, params, depth=4, operand_dtype=jnp.float32):
    skip = x
    out = None
    precision = (lax.Precision.HIGHEST if operand_dtype == jnp.float32
                 else lax.Precision.DEFAULT)
    for i in range(depth):
        w, b, a = params[i]
        dil = 2 ** i
        pad_t = 3 + (dil - 1) * 2 - 1
        pad_f = 2
        xp = jnp.pad(skip, ((0, 0), (0, 0), (pad_t, 0), (pad_f, 0)))
        out = lax.conv_general_dilated(
            xp.astype(operand_dtype), w.astype(operand_dtype),
            window_strides=(1, 1), padding="VALID",
            rhs_dilation=(dil, 1),
            dimension_numbers=("NCHW", "OIHW", "NCHW"),
            preferred_element_type=jnp.float32,
            precision=precision)
        out = out + b[None, :, None, None]
        mean = out.mean(axis=(2, 3), keepdims=True)
        var = jnp.mean((out - mean) ** 2, axis=(2, 3), keepdims=True)
        out = (out - mean) / jnp.sqrt(var + 1e-5)
        out = jnp.where(out > 0, out, a[None, :, None, None] * out)
        skip = jnp.concatenate([out, skip], axis=1)
    return out


# ----------------------------------------------------------------------------
# Deterministic parameter init (shapes per DenseNet.__init__).
# ----------------------------------------------------------------------------
def make_params(key, depth, in_channels):
    params = []
    for i in range(depth):
        cin = in_channels * (i + 1)
        key, kw, kb = jax.random.split(key, 3)
        fan_in = cin * 9
        w = jax.random.normal(kw, (in_channels, cin, 3, 3), jnp.float32) / jnp.sqrt(fan_in)
        b = 0.1 * jax.random.normal(kb, (in_channels,), jnp.float32)
        a = jnp.full((in_channels,), 0.25, jnp.float32)   # PReLU init
        params.append((w, b, a))
    return params


if __name__ == "__main__":
    depth = 4
    B, C, T, Fd = 2, 8, 16, 16   # (batch, in_channels, time, freq)

    key = jax.random.PRNGKey(0)
    key, kx = jax.random.split(key)
    x = jax.random.normal(kx, (B, C, T, Fd), jnp.float32)
    params = make_params(key, depth, C)

    tap_masks = make_tap_masks(depth, T, Fd)
    run = jax.jit(functools.partial(densenet_pallas, depth=depth))

    # (a) f32 MXU operands: structural exactness of roll+mask taps, live-row slicing,
    #     K-fusion and single-pass IN vs. the HIGHEST-precision reference.
    w_f32, alphas = prepare_params(params, depth, C, T, dtype=jnp.float32)
    out_f32 = jax.block_until_ready(run(x, w_f32, alphas, tap_masks))
    ref_f32 = jax.block_until_ready(densenet_ref(x, params, depth=depth))
    assert out_f32.shape == (B, C, T, Fd)
    assert bool(jnp.isfinite(out_f32).all())
    assert jnp.allclose(out_f32, ref_f32, atol=1e-3, rtol=1e-3)

    # (b) bf16 MXU operands + f32 accumulation (the production path per review):
    #     compared against a reference that also feeds bf16 operands to the convs,
    #     so the only difference is f32 accumulation order.
    w_bf16, _ = prepare_params(params, depth, C, T, dtype=jnp.bfloat16)
    out_bf16 = jax.block_until_ready(run(x, w_bf16, alphas, tap_masks))
    ref_bf16 = jax.block_until_ready(
        densenet_ref(x, params, depth=depth, operand_dtype=jnp.bfloat16))
    assert bool(jnp.isfinite(out_bf16).all())
    assert jnp.allclose(out_bf16, ref_bf16, atol=2e-3, rtol=2e-3)

    print("KERNEL_OK")
</pallas_src>

<mosaic_0001>
module attributes {stable_mosaic.version = 11 : i64} {
  func.func @_dense_block_kernel(%arg0: i32, %arg1: memref<1x8x256xf32, #tpu.memory_space<vmem>>, %arg2: memref<4x8x216xf32, #tpu.memory_space<vmem>>, %arg3: memref<4x8x1xf32, #tpu.memory_space<vmem>>, %arg4: memref<36x256xf32, #tpu.memory_space<vmem>>, %arg5: memref<1x8x256xf32, #tpu.memory_space<vmem>>, %arg6: memref<32x256xf32, #tpu.memory_space<vmem>>, %arg7: memref<216x256xf32, #tpu.memory_space<vmem>>) attributes {dimension_semantics = [#tpu.dimension_semantics<parallel>], iteration_bounds = array<i64: 2>, scalar_prefetch = 0 : i64, scratch_operands = 2 : i64, tpu.core_type = #tpu.core_type<tc>, window_params = [{transform_indices = @transform_0, window_bounds = array<i64: 1, 8, 256>}, {pipeline_mode = #tpu.pipeline_mode<synchronous>, transform_indices = @transform_1, window_bounds = array<i64: 4, 8, 216>}, {pipeline_mode = #tpu.pipeline_mode<synchronous>, transform_indices = @transform_2, window_bounds = array<i64: 4, 8, 1>}, {pipeline_mode = #tpu.pipeline_mode<synchronous>, transform_indices = @transform_3, window_bounds = array<i64: 36, 256>}, {transform_indices = @transform_4, window_bounds = array<i64: 1, 8, 256>}]} {
    %c0 = arith.constant 0 : index
    %c0_0 = arith.constant 0 : index
    %c0_1 = arith.constant 0 : index
    %0 = vector.load %arg1[%c0, %c0_0, %c0_1] : memref<1x8x256xf32, #tpu.memory_space<vmem>>, vector<1x8x256xf32>
    %1 = vector.shape_cast %0 : vector<1x8x256xf32> to vector<8x256xf32>
    %c24 = arith.constant 24 : index
    %c0_2 = arith.constant 0 : index
    %2 = vector.load %arg6[%c24, %c0_2] : memref<32x256xf32, #tpu.memory_space<vmem>>, vector<8x256xf32>
    tpu.vector_store %arg6[%c24, %c0_2], %1 {strides = array<i32>} : memref<32x256xf32, #tpu.memory_space<vmem>>, vector<8x256xf32>,
    %c24_3 = arith.constant 24 : index
    %c0_4 = arith.constant 0 : index
    %3 = vector.load %arg6[%c24_3, %c0_4] : memref<32x256xf32, #tpu.memory_space<vmem>>, vector<8x256xf32>
    %c0_5 = arith.constant 0 : index
    %c0_6 = arith.constant 0 : index
    %4 = vector.load %arg4[%c0_5, %c0_6] : memref<36x256xf32, #tpu.memory_space<vmem>>, vector<1x256xf32>
    %c34_i32 = arith.constant 34 : i32
    %5 = tpu.dynamic_rotate %3 by %c34_i32 dim 1 : vector<8x256xf32>, i32 -> vector<8x256xf32>
    %6 = vector.broadcast %4 : vector<1x256xf32> to vector<8x256xf32>
    %7 = arith.mulf %5, %6 : vector<8x256xf32>
    %c0_7 = arith.constant 0 : index
    %c0_8 = arith.constant 0 : index
    %8 = vector.load %arg7[%c0_7, %c0_8] : memref<216x256xf32, #tpu.memory_space<vmem>>, vector<8x256xf32>
    tpu.vector_store %arg7[%c0_7, %c0_8], %7 {strides = array<i32>} : memref<216x256xf32, #tpu.memory_space<vmem>>, vector<8x256xf32>,
    %c1 = arith.constant 1 : index
    %c0_9 = arith.constant 0 : index
    %9 = vector.load %arg4[%c1, %c0_9] : memref<36x256xf32, #tpu.memory_space<vmem>>, vector<1x256xf32>
    %c33_i32 = arith.constant 33 : i32
    %10 = tpu.dynamic_rotate %3 by %c33_i32 dim 1 : vector<8x256xf32>, i32 -> vector<8x256xf32>
    %11 = vector.broadcast %9 : vector<1x256xf32> to vector<8x256xf32>
    %12 = arith.mulf %10, %11 : vector<8x256xf32>
    %c8 = arith.constant 8 : index
    %c0_10 = arith.constant 0 : index
    %13 = vector.load %arg7[%c8, %c0_10] : memref<216x256xf32, #tpu.memory_space<vmem>>, vector<8x256xf32>
    tpu.vector_store %arg7[%c8, %c0_10], %12 {strides = array<i32>} : memref<216x256xf32, #tpu.memory_space<vmem>>, vector<8x256xf32>,
    %c2 = arith.constant 2 : index
    %c0_11 = arith.constant 0 : index
    %14 = vector.load %arg4[%c2, %c0_11] : memref<36x256xf32, #tpu.memory_space<vmem>>, vector<1x256xf32>
    %c32_i32 = arith.constant 32 : i32
    %15 = tpu.dynamic_rotate %3 by %c32_i32 dim 1 : vector<8x256xf32>, i32 -> vector<8x256xf32>
    %16 = vector.broadcast %14 : vector<1x256xf32> to vector<8x256xf32>
    %17 = arith.mulf %15, %16 : vector<8x256xf32>
    %c16 = arith.constant 16 : index
    %c0_12 = arith.constant 0 : index
    %18 = vector.load %arg7[%c16, %c0_12] : memref<216x256xf32, #tpu.memory_space<vmem>>, vector<8x256xf32>
    tpu.vector_store %arg7[%c16, %c0_12], %17 {strides = array<i32>} : memref<216x256xf32, #tpu.memory_space<vmem>>, vector<8x256xf32>,
    %c3 = arith.constant 3 : index
    %c0_13 = arith.constant 0 : index
    %19 = vector.load %arg4[%c3, %c0_13] : memref<36x256xf32, #tpu.memory_space<vmem>>, vector<1x256xf32>
    %c18_i32 = arith.constant 18 : i32
    %20 = tpu.dynamic_rotate %3 by %c18_i32 dim 1 : vector<8x256xf32>, i32 -> vector<8x256xf32>
    %21 = vector.broadcast %19 : vector<1x256xf32> to vector<8x256xf32>
    %22 = arith.mulf %20, %21 : vector<8x256xf32>
    %c24_14 = arith.constant 24 : index
    %c0_15 = arith.constant 0 : index
    %23 = vector.load %arg7[%c24_14, %c0_15] : memref<216x256xf32, #tpu.memory_space<vmem>>, vector<8x256xf32>
    tpu.vector_store %arg7[%c24_14, %c0_15], %22 {strides = array<i32>} : memref<216x256xf32, #tpu.memory_space<vmem>>, vector<8x256xf32>,
    %c4 = arith.constant 4 : index
    %c0_16 = arith.constant 0 : index
    %24 = vector.load %arg4[%c4, %c0_16] : memref<36x256xf32, #tpu.memory_space<vmem>>, vector<1x256xf32>
    %c17_i32 = arith.constant 17 : i32
    %25 = tpu.dynamic_rotate %3 by %c17_i32 dim 1 : vector<8x256xf32>, i32 -> vector<8x256xf32>
    %26 = vector.broadcast %24 : vector<1x256xf32> to vector<8x256xf32>
    %27 = arith.mulf %25, %26 : vector<8x256xf32>
    %c32 = arith.constant 32 : index
    %c0_17 = arith.constant 0 : index
    %28 = vector.load %arg7[%c32, %c0_17] : memref<216x256xf32, #tpu.memory_space<vmem>>, vector<8x256xf32>
    tpu.vector_store %arg7[%c32, %c0_17], %27 {strides = array<i32>} : memref<216x256xf32, #tpu.memory_space<vmem>>, vector<8x256xf32>,
    %c5 = arith.constant 5 : index
    %c0_18 = arith.constant 0 : index
    %29 = vector.load %arg4[%c5, %c0_18] : memref<36x256xf32, #tpu.memory_space<vmem>>, vector<1x256xf32>
    %c16_i32 = arith.constant 16 : i32
    %30 = tpu.dynamic_rotate %3 by %c16_i32 dim 1 : vector<8x256xf32>, i32 -> vector<8x256xf32>
    %31 = vector.broadcast %29 : vector<1x256xf32> to vector<8x256xf32>
    %32 = arith.mulf %30, %31 : vector<8x256xf32>
    %c40 = arith.constant 40 : index
    %c0_19 = arith.constant 0 : index
    %33 = vector.load %arg7[%c40, %c0_19] : memref<216x256xf32, #tpu.memory_space<vmem>>, vector<8x256xf32>
    tpu.vector_store %arg7[%c40, %c0_19], %32 {strides = array<i32>} : memref<216x256xf32, #tpu.memory_space<vmem>>, vector<8x256xf32>,
    %c6 = arith.constant 6 : index
    %c0_20 = arith.constant 0 : index
    %34 = vector.load %arg4[%c6, %c0_20] : memref<36x256xf32, #tpu.memory_space<vmem>>, vector<1x256xf32>
    %c2_i32 = arith.constant 2 : i32
    %35 = tpu.dynamic_rotate %3 by %c2_i32 dim 1 : vector<8x256xf32>, i32 -> vector<8x256xf32>
    %36 = vector.broadcast %34 : vector<1x256xf32> to vector<8x256xf32>
    %37 = arith.mulf %35, %36 : vector<8x256xf32>
    %c48 = arith.constant 48 : index
    %c0_21 = arith.constant 0 : index
    %38 = vector.load %arg7[%c48, %c0_21] : memref<216x256xf32, #tpu.memory_space<vmem>>, vector<8x256xf32>
    tpu.vector_store %arg7[%c48, %c0_21], %37 {strides = array<i32>} : memref<216x256xf32, #tpu.memory_space<vmem>>, vector<8x256xf32>,
    %c7 = arith.constant 7 : index
    %c0_22 = arith.constant 0 : index
    %39 = vector.load %arg4[%c7, %c0_22] : memref<36x256xf32, #tpu.memory_space<vmem>>, vector<1x256xf32>
    %c1_i32 = arith.constant 1 : i32
    %40 = tpu.dynamic_rotate %3 by %c1_i32 dim 1 : vector<8x256xf32>, i32 -> vector<8x256xf32>
    %41 = vector.broadcast %39 : vector<1x256xf32> to vector<8x256xf32>
    %42 = arith.mulf %40, %41 : vector<8x256xf32>
    %c56 = arith.constant 56 : index
    %c0_23 = arith.constant 0 : index
    %43 = vector.load %arg7[%c56, %c0_23] : memref<216x256xf32, #tpu.memory_space<vmem>>, vector<8x256xf32>
    tpu.vector_store %arg7[%c56, %c0_23], %42 {strides = array<i32>} : memref<216x256xf32, #tpu.memory_space<vmem>>, vector<8x256xf32>,
    %c64 = arith.constant 64 : index
    %c0_24 = arith.constant 0 : index
    %44 = vector.load %arg7[%c64, %c0_24] : memref<216x256xf32, #tpu.memory_space<vmem>>, vector<8x256xf32>
    tpu.vector_store %arg7[%c64, %c0_24], %3 {strides = array<i32>} : memref<216x256xf32, #tpu.memory_space<vmem>>, vector<8x256xf32>,
    %c0_25 = arith.constant 0 : index
    %c0_26 = arith.constant 0 : index
    %c0_27 = arith.constant 0 : index
    %45 = vector.load %arg2[%c0_25, %c0_26, %c0_27] : memref<4x8x216xf32, #tpu.memory_space<vmem>>, vector<1x8x72xf32>
    %46 = vector.shape_cast %45 : vector<1x8x72xf32> to vector<8x72xf32>
    %c0_28 = arith.constant 0 : index
    %c0_29 = arith.constant 0 : index
    %47 = vector.load %arg7[%c0_28, %c0_29] : memref<216x256xf32, #tpu.memory_space<vmem>>, vector<72x256xf32>
    %cst = arith.constant dense<0.000000e+00> : vector<8x256xf32>
    %48 = tpu.matmul %46, %47, %cst {dimension_numbers = #tpu.dot_dimension_numbers<[1], [0], [0], [1], [0, 0, 1, 1], [], []>} : vector<8x72xf32>, vector<72x256xf32>, vector<8x256xf32> -> vector<8x256xf32>
    %cst_30 = arith.constant dense<0.000000e+00> : vector<8xf32>
    %49 = vector.multi_reduction <add>, %48, %cst_30 [1] : vector<8x256xf32> to vector<8xf32>
    %50 = vector.shape_cast %49 : vector<8xf32> to vector<8x1xf32>
    %51 = arith.mulf %48, %48 : vector<8x256xf32>
    %cst_31 = arith.constant dense<0.000000e+00> : vector<8xf32>
    %52 = vector.multi_reduction <add>, %51, %cst_31 [1] : vector<8x256xf32> to vector<8xf32>
    %53 = vector.shape_cast %52 : vector<8xf32> to vector<8x1xf32>
    %cst_32 = arith.constant 3.906250e-03 : f32
    %54 = vector.broadcast %cst_32 : f32 to vector<8x1xf32>
    %55 = arith.mulf %50, %54 : vector<8x1xf32>
    %cst_33 = arith.constant 3.906250e-03 : f32
    %56 = vector.broadcast %cst_33 : f32 to vector<8x1xf32>
    %57 = arith.mulf %53, %56 : vector<8x1xf32>
    %58 = arith.mulf %55, %55 : vector<8x1xf32>
    %59 = arith.subf %57, %58 : vector<8x1xf32>
    %cst_34 = arith.constant 0.000000e+00 : f32
    %60 = vector.broadcast %cst_34 : f32 to vector<8x1xf32>
    %61 = arith.maximumf %59, %60 : vector<8x1xf32>
    %62 = vector.broadcast %55 : vector<8x1xf32> to vector<8x256xf32>
    %63 = arith.subf %48, %62 : vector<8x256xf32>
    %cst_35 = arith.constant 9.99999974E-6 : f32
    %64 = vector.broadcast %cst_35 : f32 to vector<8x1xf32>
    %65 = arith.addf %61, %64 : vector<8x1xf32>
    %66 = math.rsqrt %65 : vector<8x1xf32>
    %67 = vector.broadcast %66 : vector<8x1xf32> to vector<8x256xf32>
    %68 = arith.mulf %63, %67 : vector<8x256xf32>
    %cst_36 = arith.constant 0.000000e+00 : f32
    %69 = vector.broadcast %cst_36 : f32 to vector<8x256xf32>
    %70 = arith.cmpf ogt, %68, %69 : vector<8x256xf32>
    %c0_37 = arith.constant 0 : index
    %c0_38 = arith.constant 0 : index
    %c0_39 = arith.constant 0 : index
    %71 = vector.load %arg3[%c0_37, %c0_38, %c0_39] : memref<4x8x1xf32, #tpu.memory_space<vmem>>, vector<1x8x1xf32>
    %72 = vector.shape_cast %71 : vector<1x8x1xf32> to vector<8x1xf32>
    %73 = vector.broadcast %72 : vector<8x1xf32> to vector<8x256xf32>
    %74 = arith.mulf %73, %68 : vector<8x256xf32>
    %75 = arith.select %70, %68, %74 : vector<8x256xi1>, vector<8x256xf32>
    %c16_40 = arith.constant 16 : index
    %c0_41 = arith.constant 0 : index
    %76 = vector.load %arg6[%c16_40, %c0_41] : memref<32x256xf32, #tpu.memory_space<vmem>>, vector<8x256xf32>
    tpu.vector_store %arg6[%c16_40, %c0_41], %75 {strides = array<i32>} : memref<32x256xf32, #tpu.memory_space<vmem>>, vector<8x256xf32>,
    %c16_42 = arith.constant 16 : index
    %c0_43 = arith.constant 0 : index
    %77 = vector.load %arg6[%c16_42, %c0_43] : memref<32x256xf32, #tpu.memory_space<vmem>>, vector<16x256xf32>
    %c9 = arith.constant 9 : index
    %c0_44 = arith.constant 0 : index
    %78 = vector.load %arg4[%c9, %c0_44] : memref<36x256xf32, #tpu.memory_space<vmem>>, vector<1x256xf32>
    %c66_i32 = arith.constant 66 : i32
    %79 = tpu.dynamic_rotate %77 by %c66_i32 dim 1 : vector<16x256xf32>, i32 -> vector<16x256xf32>
    %80 = vector.broadcast %78 : vector<1x256xf32> to vector<16x256xf32>
    %81 = arith.mulf %79, %80 : vector<16x256xf32>
    %c0_45 = arith.constant 0 : index
    %c0_46 = arith.constant 0 : index
    %82 = vector.load %arg7[%c0_45, %c0_46] : memref<216x256xf32, #tpu.memory_space<vmem>>, vector<16x256xf32>
    tpu.vector_store %arg7[%c0_45, %c0_46], %81 {strides = array<i32>} : memref<216x256xf32, #tpu.memory_space<vmem>>, vector<16x256xf32>,
    %c10 = arith.constant 10 : index
    %c0_47 = arith.constant 0 : index
    %83 = vector.load %arg4[%c10, %c0_47] : memref<36x256xf32, #tpu.memory_space<vmem>>, vector<1x256xf32>
    %c65_i32 = arith.constant 65 : i32
    %84 = tpu.dynamic_rotate %77 by %c65_i32 dim 1 : vector<16x256xf32>, i32 -> vector<16x256xf32>
    %85 = vector.broadcast %83 : vector<1x256xf32> to vector<16x256xf32>
    %86 = arith.mulf %84, %85 : vector<16x256xf32>
    %c16_48 = arith.constant 16 : index
    %c0_49 = arith.constant 0 : index
    %87 = vector.load %arg7[%c16_48, %c0_49] : memref<216x256xf32, #tpu.memory_space<vmem>>, vector<16x256xf32>
    tpu.vector_store %arg7[%c16_48, %c0_49], %86 {strides = array<i32>} : memref<216x256xf32, #tpu.memory_space<vmem>>, vector<16x256xf32>,
    %c11 = arith.constant 11 : index
    %c0_50 = arith.constant 0 : index
    %88 = vector.load %arg4[%c11, %c0_50] : memref<36x256xf32, #tpu.memory_space<vmem>>, vector<1x256xf32>
    %c64_i32 = arith.constant 64 : i32
    %89 = tpu.dynamic_rotate %77 by %c64_i32 dim 1 : vector<16x256xf32>, i32 -> vector<16x256xf32>
    %90 = vector.broadcast %88 : vector<1x256xf32> to vector<16x256xf32>
    %91 = arith.mulf %89, %90 : vector<16x256xf32>
    %c32_51 = arith.constant 32 : index
    %c0_52 = arith.constant 0 : index
    %92 = vector.load %arg7[%c32_51, %c0_52] : memref<216x256xf32, #tpu.memory_space<vmem>>, vector<16x256xf32>
    tpu.vector_store %arg7[%c32_51, %c0_52], %91 {strides = array<i32>} : memref<216x256xf32, #tpu.memory_space<vmem>>, vector<16x256xf32>,
    %c12 = arith.constant 12 : index
    %c0_53 = arith.constant 0 : index
    %93 = vector.load %arg4[%c12, %c0_53] : memref<36x256xf32, #tpu.memory_space<vmem>>, vector<1x256xf32>
    %c34_i32_54 = arith.constant 34 : i32
    %94 = tpu.dynamic_rotate %77 by %c34_i32_54 dim 1 : vector<16x256xf32>, i32 -> vector<16x256xf32>
    %95 = vector.broadcast %93 : vector<1x256xf32> to vector<16x256xf32>
    %96 = arith.mulf %94, %95 : vector<16x256xf32>
    %c48_55 = arith.constant 48 : index
    %c0_56 = arith.constant 0 : index
    %97 = vector.load %arg7[%c48_55, %c0_56] : memref<216x256xf32, #tpu.memory_space<vmem>>, vector<16x256xf32>
    tpu.vector_store %arg7[%c48_55, %c0_56], %96 {strides = array<i32>} : memref<216x256xf32, #tpu.memory_space<vmem>>, vector<16x256xf32>,
    %c13 = arith.constant 13 : index
    %c0_57 = arith.constant 0 : index
    %98 = vector.load %arg4[%c13, %c0_57] : memref<36x256xf32, #tpu.memory_space<vmem>>, vector<1x256xf32>
    %c33_i32_58 = arith.constant 33 : i32
    %99 = tpu.dynamic_rotate %77 by %c33_i32_58 dim 1 : vector<16x256xf32>, i32 -> vector<16x256xf32>
    %100 = vector.broadcast %98 : vector<1x256xf32> to vector<16x256xf32>
    %101 = arith.mulf %99, %100 : vector<16x256xf32>
    %c64_59 = arith.constant 64 : index
    %c0_60 = arith.constant 0 : index
    %102 = vector.load %arg7[%c64_59, %c0_60] : memref<216x256xf32, #tpu.memory_space<vmem>>, vector<16x256xf32>
    tpu.vector_store %arg7[%c64_59, %c0_60], %101 {strides = array<i32>} : memref<216x256xf32, #tpu.memory_space<vmem>>, vector<16x256xf32>,
    %c14 = arith.constant 14 : index
    %c0_61 = arith.constant 0 : index
    %103 = vector.load %arg4[%c14, %c0_61] : memref<36x256xf32, #tpu.memory_space<vmem>>, vector<1x256xf32>
    %c32_i32_62 = arith.constant 32 : i32
    %104 = tpu.dynamic_rotate %77 by %c32_i32_62 dim 1 : vector<16x256xf32>, i32 -> vector<16x256xf32>
    %105 = vector.broadcast %103 : vector<1x256xf32> to vector<16x256xf32>
    %106 = arith.mulf %104, %105 : vector<16x256xf32>
    %c80 = arith.constant 80 : index
    %c0_63 = arith.constant 0 : index
    %107 = vector.load %arg7[%c80, %c0_63] : memref<216x256xf32, #tpu.memory_space<vmem>>, vector<16x256xf32>
    tpu.vector_store %arg7[%c80, %c0_63], %106 {strides = array<i32>} : memref<216x256xf32, #tpu.memory_space<vmem>>, vector<16x256xf32>,
    %c15 = arith.constant 15 : index
    %c0_64 = arith.constant 0 : index
    %108 = vector.load %arg4[%c15, %c0_64] : memref<36x256xf32, #tpu.memory_space<vmem>>, vector<1x256xf32>
    %c2_i32_65 = arith.constant 2 : i32
    %109 = tpu.dynamic_rotate %77 by %c2_i32_65 dim 1 : vector<16x256xf32>, i32 -> vector<16x256xf32>
    %110 = vector.broadcast %108 : vector<1x256xf32> to vector<16x256xf32>
    %111 = arith.mulf %109, %110 : vector<16x256xf32>
    %c96 = arith.constant 96 : index
    %c0_66 = arith.constant 0 : index
    %112 = vector.load %arg7[%c96, %c0_66] : memref<216x256xf32, #tpu.memory_space<vmem>>, vector<16x256xf32>
    tpu.vector_store %arg7[%c96, %c0_66], %111 {strides = array<i32>} : memref<216x256xf32, #tpu.memory_space<vmem>>, vector<16x256xf32>,
    %c16_67 = arith.constant 16 : index
    %c0_68 = arith.constant 0 : index
    %113 = vector.load %arg4[%c16_67, %c0_68] : memref<36x256xf32, #tpu.memory_space<vmem>>, vector<1x256xf32>
    %c1_i32_69 = arith.constant 1 : i32
    %114 = tpu.dynamic_rotate %77 by %c1_i32_69 dim 1 : vector<16x256xf32>, i32 -> vector<16x256xf32>
    %115 = vector.broadcast %113 : vector<1x256xf32> to vector<16x256xf32>
    %116 = arith.mulf %114, %115 : vector<16x256xf32>
    %c112 = arith.constant 112 : index
    %c0_70 = arith.constant 0 : index
    %117 = vector.load %arg7[%c112, %c0_70] : memref<216x256xf32, #tpu.memory_space<vmem>>, vector<16x256xf32>
    tpu.vector_store %arg7[%c112, %c0_70], %116 {strides = array<i32>} : memref<216x256xf32, #tpu.memory_space<vmem>>, vector<16x256xf32>,
    %c128 = arith.constant 128 : index
    %c0_71 = arith.constant 0 : index
    %118 = vector.load %arg7[%c128, %c0_71] : memref<216x256xf32, #tpu.memory_space<vmem>>, vector<16x256xf32>
    tpu.vector_store %arg7[%c128, %c0_71], %77 {strides = array<i32>} : memref<216x256xf32, #tpu.memory_space<vmem>>, vector<16x256xf32>,
    %c1_72 = arith.constant 1 : index
    %c0_73 = arith.constant 0 : index
    %c0_74 = arith.constant 0 : index
    %119 = vector.load %arg2[%c1_72, %c0_73, %c0_74] : memref<4x8x216xf32, #tpu.memory_space<vmem>>, vector<1x8x144xf32>
    %120 = vector.shape_cast %119 : vector<1x8x144xf32> to vector<8x144xf32>
    %c0_75 = arith.constant 0 : index
    %c0_76 = arith.constant 0 : index
    %121 = vector.load %arg7[%c0_75, %c0_76] : memref<216x256xf32, #tpu.memory_space<vmem>>, vector<144x256xf32>
    %cst_77 = arith.constant dense<0.000000e+00> : vector<8x256xf32>
    %122 = tpu.matmul %120, %121, %cst_77 {dimension_numbers = #tpu.dot_dimension_numbers<[1], [0], [0], [1], [0, 0, 1, 1], [], []>} : vector<8x144xf32>, vector<144x256xf32>, vector<8x256xf32> -> vector<8x256xf32>
    %cst_78 = arith.constant dense<0.000000e+00> : vector<8xf32>
    %123 = vector.multi_reduction <add>, %122, %cst_78 [1] : vector<8x256xf32> to vector<8xf32>
    %124 = vector.shape_cast %123 : vector<8xf32> to vector<8x1xf32>
    %125 = arith.mulf %122, %122 : vector<8x256xf32>
    %cst_79 = arith.constant dense<0.000000e+00> : vector<8xf32>
    %126 = vector.multi_reduction <add>, %125, %cst_79 [1] : vector<8x256xf32> to vector<8xf32>
    %127 = vector.shape_cast %126 : vector<8xf32> to vector<8x1xf32>
    %cst_80 = arith.constant 3.906250e-03 : f32
    %128 = vector.broadcast %cst_80 : f32 to vector<8x1xf32>
    %129 = arith.mulf %124, %128 : vector<8x1xf32>
    %cst_81 = arith.constant 3.906250e-03 : f32
    %130 = vector.broadcast %cst_81 : f32 to vector<8x1xf32>
    %131 = arith.mulf %127, %130 : vector<8x1xf32>
    %132 = arith.mulf %129, %129 : vector<8x1xf32>
    %133 = arith.subf %131, %132 : vector<8x1xf32>
    %cst_82 = arith.constant 0.000000e+00 : f32
    %134 = vector.broadcast %cst_82 : f32 to vector<8x1xf32>
    %135 = arith.maximumf %133, %134 : vector<8x1xf32>
    %136 = vector.broadcast %129 : vector<8x1xf32> to vector<8x256xf32>
    %137 = arith.subf %122, %136 : vector<8x256xf32>
    %cst_83 = arith.constant 9.99999974E-6 : f32
    %138 = vector.broadcast %cst_83 : f32 to vector<8x1xf32>
    %139 = arith.addf %135, %138 : vector<8x1xf32>
    %140 = math.rsqrt %139 : vector<8x1xf32>
    %141 = vector.broadcast %140 : vector<8x1xf32> to vector<8x256xf32>
    %142 = arith.mulf %137, %141 : vector<8x256xf32>
    %cst_84 = arith.constant 0.000000e+00 : f32
    %143 = vector.broadcast %cst_84 : f32 to vector<8x256xf32>
    %144 = arith.cmpf ogt, %142, %143 : vector<8x256xf32>
    %c1_85 = arith.constant 1 : index
    %c0_86 = arith.constant 0 : index
    %c0_87 = arith.constant 0 : index
    %145 = vector.load %arg3[%c1_85, %c0_86, %c0_87] : memref<4x8x1xf32, #tpu.memory_space<vmem>>, vector<1x8x1xf32>
    %146 = vector.shape_cast %145 : vector<1x8x1xf32> to vector<8x1xf32>
    %147 = vector.broadcast %146 : vector<8x1xf32> to vector<8x256xf32>
    %148 = arith.mulf %147, %142 : vector<8x256xf32>
    %149 = arith.select %144, %142, %148 : vector<8x256xi1>, vector<8x256xf32>
    %c8_88 = arith.constant 8 : index
    %c0_89 = arith.constant 0 : index
    %150 = vector.load %arg6[%c8_88, %c0_89] : memref<32x256xf32, #tpu.memory_space<vmem>>, vector<8x256xf32>
    tpu.vector_store %arg6[%c8_88, %c0_89], %149 {strides = array<i32>} : memref<32x256xf32, #tpu.memory_space<vmem>>, vector<8x256xf32>,
    %c8_90 = arith.constant 8 : index
    %c0_91 = arith.constant 0 : index
    %151 = vector.load %arg6[%c8_90, %c0_91] : memref<32x256xf32, #tpu.memory_space<vmem>>, vector<24x256xf32>
    %c18 = arith.constant 18 : index
    %c0_92 = arith.constant 0 : index
    %152 = vector.load %arg4[%c18, %c0_92] : memref<36x256xf32, #tpu.memory_space<vmem>>, vector<1x256xf32>
    %c130_i32 = arith.constant 130 : i32
    %153 = tpu.dynamic_rotate %151 by %c130_i32 dim 1 : vector<24x256xf32>, i32 -> vector<24x256xf32>
    %154 = vector.broadcast %152 : vector<1x256xf32> to vector<24x256xf32>
    %155 = arith.mulf %153, %154 : vector<24x256xf32>
    %c0_93 = arith.constant 0 : index
    %c0_94 = arith.constant 0 : index
    %156 = vector.load %arg7[%c0_93, %c0_94] : memref<216x256xf32, #tpu.memory_space<vmem>>, vector<24x256xf32>
    tpu.vector_store %arg7[%c0_93, %c0_94], %155 {strides = array<i32>} : memref<216x256xf32, #tpu.memory_space<vmem>>, vector<24x256xf32>,
    %c19 = arith.constant 19 : index
    %c0_95 = arith.constant 0 : index
    %157 = vector.load %arg4[%c19, %c0_95] : memref<36x256xf32, #tpu.memory_space<vmem>>, vector<1x256xf32>
    %c129_i32 = arith.constant 129 : i32
    %158 = tpu.dynamic_rotate %151 by %c129_i32 dim 1 : vector<24x256xf32>, i32 -> vector<24x256xf32>
    %159 = vector.broadcast %157 : vector<1x256xf32> to vector<24x256xf32>
    %160 = arith.mulf %158, %159 : vector<24x256xf32>
    %c24_96 = arith.constant 24 : index
    %c0_97 = arith.constant 0 : index
    %161 = vector.load %arg7[%c24_96, %c0_97] : memref<216x256xf32, #tpu.memory_space<vmem>>, vector<24x256xf32>
    tpu.vector_store %arg7[%c24_96, %c0_97], %160 {strides = array<i32>} : memref<216x256xf32, #tpu.memory_space<vmem>>, vector<24x256xf32>,
    %c20 = arith.constant 20 : index
    %c0_98 = arith.constant 0 : index
    %162 = vector.load %arg4[%c20, %c0_98] : memref<36x256xf32, #tpu.memory_space<vmem>>, vector<1x256xf32>
    %c128_i32 = arith.constant 128 : i32
    %163 = tpu.dynamic_rotate %151 by %c128_i32 dim 1 : vector<24x256xf32>, i32 -> vector<24x256xf32>
    %164 = vector.broadcast %162 : vector<1x256xf32> to vector<24x256xf32>
    %165 = arith.mulf %163, %164 : vector<24x256xf32>
    %c48_99 = arith.constant 48 : index
    %c0_100 = arith.constant 0 : index
    %166 = vector.load %arg7[%c48_99, %c0_100] : memref<216x256xf32, #tpu.memory_space<vmem>>, vector<24x256xf32>
    tpu.vector_store %arg7[%c48_99, %c0_100], %165 {strides = array<i32>} : memref<216x256xf32, #tpu.memory_space<vmem>>, vector<24x256xf32>,
    %c21 = arith.constant 21 : index
    %c0_101 = arith.constant 0 : index
    %167 = vector.load %arg4[%c21, %c0_101] : memref<36x256xf32, #tpu.memory_space<vmem>>, vector<1x256xf32>
    %c66_i32_102 = arith.constant 66 : i32
    %168 = tpu.dynamic_rotate %151 by %c66_i32_102 dim 1 : vector<24x256xf32>, i32 -> vector<24x256xf32>
    %169 = vector.broadcast %167 : vector<1x256xf32> to vector<24x256xf32>
    %170 = arith.mulf %168, %169 : vector<24x256xf32>
    %c72 = arith.constant 72 : index
    %c0_103 = arith.constant 0 : index
    %171 = vector.load %arg7[%c72, %c0_103] : memref<216x256xf32, #tpu.memory_space<vmem>>, vector<24x256xf32>
    tpu.vector_store %arg7[%c72, %c0_103], %170 {strides = array<i32>} : memref<216x256xf32, #tpu.memory_space<vmem>>, vector<24x256xf32>,
    %c22 = arith.constant 22 : index
    %c0_104 = arith.constant 0 : index
    %172 = vector.load %arg4[%c22, %c0_104] : memref<36x256xf32, #tpu.memory_space<vmem>>, vector<1x256xf32>
    %c65_i32_105 = arith.constant 65 : i32
    %173 = tpu.dynamic_rotate %151 by %c65_i32_105 dim 1 : vector<24x256xf32>, i32 -> vector<24x256xf32>
    %174 = vector.broadcast %172 : vector<1x256xf32> to vector<24x256xf32>
    %175 = arith.mulf %173, %174 : vector<24x256xf32>
    %c96_106 = arith.constant 96 : index
    %c0_107 = arith.constant 0 : index
    %176 = vector.load %arg7[%c96_106, %c0_107] : memref<216x256xf32, #tpu.memory_space<vmem>>, vector<24x256xf32>
    tpu.vector_store %arg7[%c96_106, %c0_107], %175 {strides = array<i32>} : memref<216x256xf32, #tpu.memory_space<vmem>>, vector<24x256xf32>,
    %c23 = arith.constant 23 : index
    %c0_108 = arith.constant 0 : index
    %177 = vector.load %arg4[%c23, %c0_108] : memref<36x256xf32, #tpu.memory_space<vmem>>, vector<1x256xf32>
    %c64_i32_109 = arith.constant 64 : i32
    %178 = tpu.dynamic_rotate %151 by %c64_i32_109 dim 1 : vector<24x256xf32>, i32 -> vector<24x256xf32>
    %179 = vector.broadcast %177 : vector<1x256xf32> to vector<24x256xf32>
    %180 = arith.mulf %178, %179 : vector<24x256xf32>
    %c120 = arith.constant 120 : index
    %c0_110 = arith.constant 0 : index
    %181 = vector.load %arg7[%c120, %c0_110] : memref<216x256xf32, #tpu.memory_space<vmem>>, vector<24x256xf32>
    tpu.vector_store %arg7[%c120, %c0_110], %180 {strides = array<i32>} : memref<216x256xf32, #tpu.memory_space<vmem>>, vector<24x256xf32>,
    %c24_111 = arith.constant 24 : index
    %c0_112 = arith.constant 0 : index
    %182 = vector.load %arg4[%c24_111, %c0_112] : memref<36x256xf32, #tpu.memory_space<vmem>>, vector<1x256xf32>
    %c2_i32_113 = arith.constant 2 : i32
    %183 = tpu.dynamic_rotate %151 by %c2_i32_113 dim 1 : vector<24x256xf32>, i32 -> vector<24x256xf32>
    %184 = vector.broadcast %182 : vector<1x256xf32> to vector<24x256xf32>
    %185 = arith.mulf %183, %184 : vector<24x256xf32>
    %c144 = arith.constant 144 : index
    %c0_114 = arith.constant 0 : index
    %186 = vector.load %arg7[%c144, %c0_114] : memref<216x256xf32, #tpu.memory_space<vmem>>, vector<24x256xf32>
    tpu.vector_store %arg7[%c144, %c0_114], %185 {strides = array<i32>} : memref<216x256xf32, #tpu.memory_space<vmem>>, vector<24x256xf32>,
    %c25 = arith.constant 25 : index
    %c0_115 = arith.constant 0 : index
    %187 = vector.load %arg4[%c25, %c0_115] : memref<36x256xf32, #tpu.memory_space<vmem>>, vector<1x256xf32>
    %c1_i32_116 = arith.constant 1 : i32
    %188 = tpu.dynamic_rotate %151 by %c1_i32_116 dim 1 : vector<24x256xf32>, i32 -> vector<24x256xf32>
    %189 = vector.broadcast %187 : vector<1x256xf32> to vector<24x256xf32>
    %190 = arith.mulf %188, %189 : vector<24x256xf32>
    %c168 = arith.constant 168 : index
    %c0_117 = arith.constant 0 : index
    %191 = vector.load %arg7[%c168, %c0_117] : memref<216x256xf32, #tpu.memory_space<vmem>>, vector<24x256xf32>
    tpu.vector_store %arg7[%c168, %c0_117], %190 {strides = array<i32>} : memref<216x256xf32, #tpu.memory_space<vmem>>, vector<24x256xf32>,
    %c192 = arith.constant 192 : index
    %c0_118 = arith.constant 0 : index
    %192 = vector.load %arg7[%c192, %c0_118] : memref<216x256xf32, #tpu.memory_space<vmem>>, vector<24x256xf32>
    tpu.vector_store %arg7[%c192, %c0_118], %151 {strides = array<i32>} : memref<216x256xf32, #tpu.memory_space<vmem>>, vector<24x256xf32>,
    %c2_119 = arith.constant 2 : index
    %c0_120 = arith.constant 0 : index
    %c0_121 = arith.constant 0 : index
    %193 = vector.load %arg2[%c2_119, %c0_120, %c0_121] : memref<4x8x216xf32, #tpu.memory_space<vmem>>, vector<1x8x216xf32>
    %194 = vector.shape_cast %193 : vector<1x8x216xf32> to vector<8x216xf32>
    %c0_122 = arith.constant 0 : index
    %c0_123 = arith.constant 0 : index
    %195 = vector.load %arg7[%c0_122, %c0_123] : memref<216x256xf32, #tpu.memory_space<vmem>>, vector<216x256xf32>
    %cst_124 = arith.constant dense<0.000000e+00> : vector<8x256xf32>
    %196 = tpu.matmul %194, %195, %cst_124 {dimension_numbers = #tpu.dot_dimension_numbers<[1], [0], [0], [1], [0, 0, 1, 1], [], []>} : vector<8x216xf32>, vector<216x256xf32>, vector<8x256xf32> -> vector<8x256xf32>
    %cst_125 = arith.constant dense<0.000000e+00> : vector<8xf32>
    %197 = vector.multi_reduction <add>, %196, %cst_125 [1] : vector<8x256xf32> to vector<8xf32>
    %198 = vector.shape_cast %197 : vector<8xf32> to vector<8x1xf32>
    %199 = arith.mulf %196, %196 : vector<8x256xf32>
    %cst_126 = arith.constant dense<0.000000e+00> : vector<8xf32>
    %200 = vector.multi_reduction <add>, %199, %cst_126 [1] : vector<8x256xf32> to vector<8xf32>
    %201 = vector.shape_cast %200 : vector<8xf32> to vector<8x1xf32>
    %cst_127 = arith.constant 3.906250e-03 : f32
    %202 = vector.broadcast %cst_127 : f32 to vector<8x1xf32>
    %203 = arith.mulf %198, %202 : vector<8x1xf32>
    %cst_128 = arith.constant 3.906250e-03 : f32
    %204 = vector.broadcast %cst_128 : f32 to vector<8x1xf32>
    %205 = arith.mulf %201, %204 : vector<8x1xf32>
    %206 = arith.mulf %203, %203 : vector<8x1xf32>
    %207 = arith.subf %205, %206 : vector<8x1xf32>
    %cst_129 = arith.constant 0.000000e+00 : f32
    %208 = vector.broadcast %cst_129 : f32 to vector<8x1xf32>
    %209 = arith.maximumf %207, %208 : vector<8x1xf32>
    %210 = vector.broadcast %203 : vector<8x1xf32> to vector<8x256xf32>
    %211 = arith.subf %196, %210 : vector<8x256xf32>
    %cst_130 = arith.constant 9.99999974E-6 : f32
    %212 = vector.broadcast %cst_130 : f32 to vector<8x1xf32>
    %213 = arith.addf %209, %212 : vector<8x1xf32>
    %214 = math.rsqrt %213 : vector<8x1xf32>
    %215 = vector.broadcast %214 : vector<8x1xf32> to vector<8x256xf32>
    %216 = arith.mulf %211, %215 : vector<8x256xf32>
    %cst_131 = arith.constant 0.000000e+00 : f32
    %217 = vector.broadcast %cst_131 : f32 to vector<8x256xf32>
    %218 = arith.cmpf ogt, %216, %217 : vector<8x256xf32>
    %c2_132 = arith.constant 2 : index
    %c0_133 = arith.constant 0 : index
    %c0_134 = arith.constant 0 : index
    %219 = vector.load %arg3[%c2_132, %c0_133, %c0_134] : memref<4x8x1xf32, #tpu.memory_space<vmem>>, vector<1x8x1xf32>
    %220 = vector.shape_cast %219 : vector<1x8x1xf32> to vector<8x1xf32>
    %221 = vector.broadcast %220 : vector<8x1xf32> to vector<8x256xf32>
    %222 = arith.mulf %221, %216 : vector<8x256xf32>
    %223 = arith.select %218, %216, %222 : vector<8x256xi1>, vector<8x256xf32>
    %c0_135 = arith.constant 0 : index
    %c0_136 = arith.constant 0 : index
    %224 = vector.load %arg6[%c0_135, %c0_136] : memref<32x256xf32, #tpu.memory_space<vmem>>, vector<8x256xf32>
    tpu.vector_store %arg6[%c0_135, %c0_136], %223 {strides = array<i32>} : memref<32x256xf32, #tpu.memory_space<vmem>>, vector<8x256xf32>,
    %c0_137 = arith.constant 0 : index
    %c0_138 = arith.constant 0 : index
    %225 = vector.load %arg6[%c0_137, %c0_138] : memref<32x256xf32, #tpu.memory_space<vmem>>, vector<32x256xf32>
    %c30 = arith.constant 30 : index
    %c0_139 = arith.constant 0 : index
    %226 = vector.load %arg4[%c30, %c0_139] : memref<36x256xf32, #tpu.memory_space<vmem>>, vector<1x256xf32>
    %c130_i32_140 = arith.constant 130 : i32
    %227 = tpu.dynamic_rotate %225 by %c130_i32_140 dim 1 : vector<32x256xf32>, i32 -> vector<32x256xf32>
    %228 = vector.broadcast %226 : vector<1x256xf32> to vector<32x256xf32>
    %229 = arith.mulf %227, %228 : vector<32x256xf32>
    %c0_141 = arith.constant 0 : index
    %c0_142 = arith.constant 0 : index
    %230 = vector.load %arg7[%c0_141, %c0_142] : memref<216x256xf32, #tpu.memory_space<vmem>>, vector<32x256xf32>
    tpu.vector_store %arg7[%c0_141, %c0_142], %229 {strides = array<i32>} : memref<216x256xf32, #tpu.memory_space<vmem>>, vector<32x256xf32>,
    %c31 = arith.constant 31 : index
    %c0_143 = arith.constant 0 : index
    %231 = vector.load %arg4[%c31, %c0_143] : memref<36x256xf32, #tpu.memory_space<vmem>>, vector<1x256xf32>
    %c129_i32_144 = arith.constant 129 : i32
    %232 = tpu.dynamic_rotate %225 by %c129_i32_144 dim 1 : vector<32x256xf32>, i32 -> vector<32x256xf32>
    %233 = vector.broadcast %231 : vector<1x256xf32> to vector<32x256xf32>
    %234 = arith.mulf %232, %233 : vector<32x256xf32>
    %c32_145 = arith.constant 32 : index
    %c0_146 = arith.constant 0 : index
    %235 = vector.load %arg7[%c32_145, %c0_146] : memref<216x256xf32, #tpu.memory_space<vmem>>, vector<32x256xf32>
    tpu.vector_store %arg7[%c32_145, %c0_146], %234 {strides = array<i32>} : memref<216x256xf32, #tpu.memory_space<vmem>>, vector<32x256xf32>,
    %c32_147 = arith.constant 32 : index
    %c0_148 = arith.constant 0 : index
    %236 = vector.load %arg4[%c32_147, %c0_148] : memref<36x256xf32, #tpu.memory_space<vmem>>, vector<1x256xf32>
    %c128_i32_149 = arith.constant 128 : i32
    %237 = tpu.dynamic_rotate %225 by %c128_i32_149 dim 1 : vector<32x256xf32>, i32 -> vector<32x256xf32>
    %238 = vector.broadcast %236 : vector<1x256xf32> to vector<32x256xf32>
    %239 = arith.mulf %237, %238 : vector<32x256xf32>
    %c64_150 = arith.constant 64 : index
    %c0_151 = arith.constant 0 : index
    %240 = vector.load %arg7[%c64_150, %c0_151] : memref<216x256xf32, #tpu.memory_space<vmem>>, vector<32x256xf32>
    tpu.vector_store %arg7[%c64_150, %c0_151], %239 {strides = array<i32>} : memref<216x256xf32, #tpu.memory_space<vmem>>, vector<32x256xf32>,
    %c33 = arith.constant 33 : index
    %c0_152 = arith.constant 0 : index
    %241 = vector.load %arg4[%c33, %c0_152] : memref<36x256xf32, #tpu.memory_space<vmem>>, vector<1x256xf32>
    %c2_i32_153 = arith.constant 2 : i32
    %242 = tpu.dynamic_rotate %225 by %c2_i32_153 dim 1 : vector<32x256xf32>, i32 -> vector<32x256xf32>
    %243 = vector.broadcast %241 : vector<1x256xf32> to vector<32x256xf32>
    %244 = arith.mulf %242, %243 : vector<32x256xf32>
    %c96_154 = arith.constant 96 : index
    %c0_155 = arith.constant 0 : index
    %245 = vector.load %arg7[%c96_154, %c0_155] : memref<216x256xf32, #tpu.memory_space<vmem>>, vector<32x256xf32>
    tpu.vector_store %arg7[%c96_154, %c0_155], %244 {strides = array<i32>} : memref<216x256xf32, #tpu.memory_space<vmem>>, vector<32x256xf32>,
    %c34 = arith.constant 34 : index
    %c0_156 = arith.constant 0 : index
    %246 = vector.load %arg4[%c34, %c0_156] : memref<36x256xf32, #tpu.memory_space<vmem>>, vector<1x256xf32>
    %c1_i32_157 = arith.constant 1 : i32
    %247 = tpu.dynamic_rotate %225 by %c1_i32_157 dim 1 : vector<32x256xf32>, i32 -> vector<32x256xf32>
    %248 = vector.broadcast %246 : vector<1x256xf32> to vector<32x256xf32>
    %249 = arith.mulf %247, %248 : vector<32x256xf32>
    %c128_158 = arith.constant 128 : index
    %c0_159 = arith.constant 0 : index
    %250 = vector.load %arg7[%c128_158, %c0_159] : memref<216x256xf32, #tpu.memory_space<vmem>>, vector<32x256xf32>
    tpu.vector_store %arg7[%c128_158, %c0_159], %249 {strides = array<i32>} : memref<216x256xf32, #tpu.memory_space<vmem>>, vector<32x256xf32>,
    %c160 = arith.constant 160 : index
    %c0_160 = arith.constant 0 : index
    %251 = vector.load %arg7[%c160, %c0_160] : memref<216x256xf32, #tpu.memory_space<vmem>>, vector<32x256xf32>
    tpu.vector_store %arg7[%c160, %c0_160], %225 {strides = array<i32>} : memref<216x256xf32, #tpu.memory_space<vmem>>, vector<32x256xf32>,
    %c3_161 = arith.constant 3 : index
    %c0_162 = arith.constant 0 : index
    %c0_163 = arith.constant 0 : index
    %252 = vector.load %arg2[%c3_161, %c0_162, %c0_163] : memref<4x8x216xf32, #tpu.memory_space<vmem>>, vector<1x8x192xf32>
    %253 = vector.shape_cast %252 : vector<1x8x192xf32> to vector<8x192xf32>
    %c0_164 = arith.constant 0 : index
    %c0_165 = arith.constant 0 : index
    %254 = vector.load %arg7[%c0_164, %c0_165] : memref<216x256xf32, #tpu.memory_space<vmem>>, vector<192x256xf32>
    %cst_166 = arith.constant dense<0.000000e+00> : vector<8x256xf32>
    %255 = tpu.matmul %253, %254, %cst_166 {dimension_numbers = #tpu.dot_dimension_numbers<[1], [0], [0], [1], [0, 0, 1, 1], [], []>} : vector<8x192xf32>, vector<192x256xf32>, vector<8x256xf32> -> vector<8x256xf32>
    %cst_167 = arith.constant dense<0.000000e+00> : vector<8xf32>
    %256 = vector.multi_reduction <add>, %255, %cst_167 [1] : vector<8x256xf32> to vector<8xf32>
    %257 = vector.shape_cast %256 : vector<8xf32> to vector<8x1xf32>
    %258 = arith.mulf %255, %255 : vector<8x256xf32>
    %cst_168 = arith.constant dense<0.000000e+00> : vector<8xf32>
    %259 = vector.multi_reduction <add>, %258, %cst_168 [1] : vector<8x256xf32> to vector<8xf32>
    %260 = vector.shape_cast %259 : vector<8xf32> to vector<8x1xf32>
    %cst_169 = arith.constant 3.906250e-03 : f32
    %261 = vector.broadcast %cst_169 : f32 to vector<8x1xf32>
    %262 = arith.mulf %257, %261 : vector<8x1xf32>
    %cst_170 = arith.constant 3.906250e-03 : f32
    %263 = vector.broadcast %cst_170 : f32 to vector<8x1xf32>
    %264 = arith.mulf %260, %263 : vector<8x1xf32>
    %265 = arith.mulf %262, %262 : vector<8x1xf32>
    %266 = arith.subf %264, %265 : vector<8x1xf32>
    %cst_171 = arith.constant 0.000000e+00 : f32
    %267 = vector.broadcast %cst_171 : f32 to vector<8x1xf32>
    %268 = arith.maximumf %266, %267 : vector<8x1xf32>
    %269 = vector.broadcast %262 : vector<8x1xf32> to vector<8x256xf32>
    %270 = arith.subf %255, %269 : vector<8x256xf32>
    %cst_172 = arith.constant 9.99999974E-6 : f32
    %271 = vector.broadcast %cst_172 : f32 to vector<8x1xf32>
    %272 = arith.addf %268, %271 : vector<8x1xf32>
    %273 = math.rsqrt %272 : vector<8x1xf32>
    %274 = vector.broadcast %273 : vector<8x1xf32> to vector<8x256xf32>
    %275 = arith.mulf %270, %274 : vector<8x256xf32>
    %cst_173 = arith.constant 0.000000e+00 : f32
    %276 = vector.broadcast %cst_173 : f32 to vector<8x256xf32>
    %277 = arith.cmpf ogt, %275, %276 : vector<8x256xf32>
    %c3_174 = arith.constant 3 : index
    %c0_175 = arith.constant 0 : index
    %c0_176 = arith.constant 0 : index
    %278 = vector.load %arg3[%c3_174, %c0_175, %c0_176] : memref<4x8x1xf32, #tpu.memory_space<vmem>>, vector<1x8x1xf32>
    %279 = vector.shape_cast %278 : vector<1x8x1xf32> to vector<8x1xf32>
    %280 = vector.broadcast %279 : vector<8x1xf32> to vector<8x256xf32>
    %281 = arith.mulf %280, %275 : vector<8x256xf32>
    %282 = arith.select %277, %275, %281 : vector<8x256xi1>, vector<8x256xf32>
    %c0_177 = arith.constant 0 : index
    %c0_178 = arith.constant 0 : index
    %c0_179 = arith.constant 0 : index
    %283 = vector.load %arg5[%c0_177, %c0_178, %c0_179] : memref<1x8x256xf32, #tpu.memory_space<vmem>>, vector<1x8x256xf32>
    %284 = vector.shape_cast %283 : vector<1x8x256xf32> to vector<8x256xf32>
    %285 = vector.shape_cast %282 : vector<8x256xf32> to vector<1x8x256xf32>
    tpu.vector_store %arg5[%c0_177, %c0_178, %c0_179], %285 {strides = array<i32>} : memref<1x8x256xf32, #tpu.memory_space<vmem>>, vector<1x8x256xf32>,
    return
  }
  func.func @transform_0(%arg0: i32) -> (i32, i32, i32) {
    %c0_i32 = arith.constant 0 : i32
    %c0_i32_0 = arith.constant 0 : i32
    %c0_i32_1 = arith.constant 0 : i32
    return %arg0, %c0_i32, %c0_i32_0 : i32, i32, i32
  }
  func.func @transform_1(%arg0: i32) -> (i32, i32, i32) {
    %c0_i32 = arith.constant 0 : i32
    %c0_i32_0 = arith.constant 0 : i32
    %c0_i32_1 = arith.constant 0 : i32
    %c0_i32_2 = arith.constant 0 : i32
    return %c0_i32, %c0_i32_0, %c0_i32_1 : i32, i32, i32
  }
  func.func @transform_2(%arg0: i32) -> (i32, i32, i32) {
    %c0_i32 = arith.constant 0 : i32
    %c0_i32_0 = arith.constant 0 : i32
    %c0_i32_1 = arith.constant 0 : i32
    %c0_i32_2 = arith.constant 0 : i32
    return %c0_i32, %c0_i32_0, %c0_i32_1 : i32, i32, i32
  }
  func.func @transform_3(%arg0: i32) -> (i32, i32) {
    %c0_i32 = arith.constant 0 : i32
    %c0_i32_0 = arith.constant 0 : i32
    %c0_i32_1 = arith.constant 0 : i32
    return %c0_i32, %c0_i32_0 : i32, i32
  }
  func.func @transform_4(%arg0: i32) -> (i32, i32, i32) {
    %c0_i32 = arith.constant 0 : i32
    %c0_i32_0 = arith.constant 0 : i32
    %c0_i32_1 = arith.constant 0 : i32
    return %arg0, %c0_i32, %c0_i32_0 : i32, i32, i32
  }
}

</mosaic_0001>

<llo_original>
// kernel: densenet_pallas.1
$region0: #{densenet_pallas.1}
  #allocation0 [shape = 'u32[]', space=smem, size = 0x4, offset = 0x4, fixed_abs, tag = 'smem constant byte address 0x4 - core index']
  #allocation1 [shape = 'u32[144,128]{1,0:T(1,128)}', space=vmem, size = 0x12000, scoped, tag = 'internal scratch']
  #allocation2 [shape = 'f32[32,256]{1,0:T(8,128)}', space=vmem, size = 0x8000, scoped, tag = 'scratch operand']
  #allocation3 [shape = 'f32[216,256]{1,0:T(8,128)}', space=vmem, size = 0x36000, scoped, tag = 'scratch operand']
  %s0 = inlined_call_operand.vmem [shape: f32[2,8,256], index: 0, kind: input, shape index: {}]
  %s1 = inlined_call_operand.vmem [shape: f32[4,8,216], index: 1, kind: input, shape index: {}]
  %s2 = inlined_call_operand.vmem [shape: f32[4,8,1], index: 2, kind: input, shape index: {}]
  %s3 = inlined_call_operand.vmem [shape: f32[36,256], index: 3, kind: input, shape index: {}]
  %s4 = inlined_call_operand.vmem [shape: f32[2,8,256], index: 4, kind: output, shape index: {}]
  %s5 = sld [smem:[#allocation0]]
  $region49: #{densenet_pallas.1} parent=0
    _
  %s7 = ssub.s32 1, %s5
  %s8 = scalar_select 0, %s7, %s5
  loop: start=0, step=1, limit=4
  $region2: #{densenet_pallas.1} parent=0 // loop_pre_header
    _
  $region3: #{densenet_pallas.1} parent=0 // loop_header
    %s10 = sphi 0, %s14
    %p11 = scmp.ge.s32.totalorder %s10, 4
    %s20 = sphi 0, %s22
    %s23 = sphi 0, %s20
    %s24 = sphi 0, %s23
    %s40 = sphi 0, %s24
    %s44 = sphi 0, %s44
    %s46 = sphi 0, %s44
    %s47 = sphi 0, %s46
    %s61 = sphi 0, %s47
    %s65 = sphi 0, %s65
    %s67 = sphi 0, %s65
    %s68 = sphi 0, %s67
    %s82 = sphi 0, %s68
    %s86 = sphi 0, %s86
    %s88 = sphi 0, %s86
    %s89 = sphi 0, %s88
    %s103 = sphi 0, %s89
    %s109 = sphi 0, %s111
    %s112 = sphi 0, %s109
    %s113 = sphi 0, %s112
    %s129 = sphi 0, %s113
  $region4: #{densenet_pallas.1} parent=0 // loop_header_branch
    %13 = sbr.rel (%p11) target = $region8
  $region5: #{densenet_pallas.1} parent=0 // loop_body
    %s15 = ssub.s32 %s10, 1
    %s16 = ssub.s32 %s10, 2
    %s17 = sadd.s32 %s10, 1
    %s18 = ssub.s32 %s10, %s17
    %p19 = scmp.eq.s32.totalorder %s18, 0
    %s21 = sadd.s32 %s20, 1
    %s22 = scalar_select %p19, %s20, %s21
    %p25 = pneg %p19
    %p26 = scmp.eq.s32.totalorder %s10, 1
    %p27 = por %p25, %p26
    %p28 = scmp.ne.s32.totalorder %s20, %s23
    %p29 = scmp.eq.s32.totalorder %s10, 0
    %p30 = por %p28, %p29
    %p31 = scmp.ne.s32.totalorder %s20, %s23
    %p32 = scmp.eq.s32.totalorder %s15, 1
    %p33 = por %p31, %p32
    %p34 = scmp.ne.s32.totalorder %s23, %s24
    %p35 = scmp.eq.s32.totalorder %s15, 0
    %p36 = por %p34, %p35
    %p37 = scmp.ne.s32.totalorder %s23, %s24
    %p38 = scmp.eq.s32.totalorder %s16, 1
    %p39 = por %p37, %p38
    %p41 = scmp.ne.s32.totalorder %s24, %s40
    %p42 = scmp.eq.s32.totalorder %s16, 0
    %p43 = por %p41, %p42
    %s45 = sadd.s32 %s44, 1
    %p48 = scmp.eq.s32.totalorder %s10, 1
    %p49 = scmp.ne.s32.totalorder %s44, %s46
    %p50 = scmp.eq.s32.totalorder %s10, 0
    %p51 = por %p49, %p50
    %p52 = scmp.ne.s32.totalorder %s44, %s46
    %p53 = scmp.eq.s32.totalorder %s15, 1
    %p54 = por %p52, %p53
    %p55 = scmp.ne.s32.totalorder %s46, %s47
    %p56 = scmp.eq.s32.totalorder %s15, 0
    %p57 = por %p55, %p56
    %p58 = scmp.ne.s32.totalorder %s46, %s47
    %p59 = scmp.eq.s32.totalorder %s16, 1
    %p60 = por %p58, %p59
    %p62 = scmp.ne.s32.totalorder %s47, %s61
    %p63 = scmp.eq.s32.totalorder %s16, 0
    %p64 = por %p62, %p63
    %s66 = sadd.s32 %s65, 1
    %p69 = scmp.eq.s32.totalorder %s10, 1
    %p70 = scmp.ne.s32.totalorder %s65, %s67
    %p71 = scmp.eq.s32.totalorder %s10, 0
    %p72 = por %p70, %p71
    %p73 = scmp.ne.s32.totalorder %s65, %s67
    %p74 = scmp.eq.s32.totalorder %s15, 1
    %p75 = por %p73, %p74
    %p76 = scmp.ne.s32.totalorder %s67, %s68
    %p77 = scmp.eq.s32.totalorder %s15, 0
    %p78 = por %p76, %p77
    %p79 = scmp.ne.s32.totalorder %s67, %s68
    %p80 = scmp.eq.s32.totalorder %s16, 1
    %p81 = por %p79, %p80
    %p83 = scmp.ne.s32.totalorder %s68, %s82
    %p84 = scmp.eq.s32.totalorder %s16, 0
    %p85 = por %p83, %p84
    %s87 = sadd.s32 %s86, 1
    %p90 = scmp.eq.s32.totalorder %s10, 1
    %p91 = scmp.ne.s32.totalorder %s86, %s88
    %p92 = scmp.eq.s32.totalorder %s10, 0
    %p93 = por %p91, %p92
    %p94 = scmp.ne.s32.totalorder %s86, %s88
    %p95 = scmp.eq.s32.totalorder %s15, 1
    %p96 = por %p94, %p95
    %p97 = scmp.ne.s32.totalorder %s88, %s89
    %p98 = scmp.eq.s32.totalorder %s15, 0
    %p99 = por %p97, %p98
    %p100 = scmp.ne.s32.totalorder %s88, %s89
    %p101 = scmp.eq.s32.totalorder %s16, 1
    %p102 = por %p100, %p101
    %p104 = scmp.ne.s32.totalorder %s89, %s103
    %p105 = scmp.eq.s32.totalorder %s16, 0
    %p106 = por %p104, %p105
    %s107 = ssub.s32 %s10, %s17
    %p108 = scmp.eq.s32.totalorder %s107, 0
    %s110 = sadd.s32 %s109, 1
    %s111 = scalar_select %p108, %s109, %s110
    %p114 = pneg %p108
    %p115 = scmp.eq.s32.totalorder %s10, 1
    %p116 = por %p114, %p115
    %p117 = scmp.ne.s32.totalorder %s109, %s112
    %p118 = scmp.eq.s32.totalorder %s10, 0
    %p119 = por %p117, %p118
    %p120 = scmp.ne.s32.totalorder %s109, %s112
    %p121 = scmp.eq.s32.totalorder %s15, 1
    %p122 = por %p120, %p121
    %p123 = scmp.ne.s32.totalorder %s112, %s113
    %p124 = scmp.eq.s32.totalorder %s15, 0
    %p125 = por %p123, %p124
    %p126 = scmp.ne.s32.totalorder %s112, %s113
    %p127 = scmp.eq.s32.totalorder %s16, 1
    %p128 = por %p126, %p127
    %p130 = scmp.ne.s32.totalorder %s113, %s129
    %p131 = scmp.eq.s32.totalorder %s16, 0
    %p132 = por %p130, %p131
    %p133 = scmp.le.s32.totalorder 1, %s10
    %p134 = scmp.lt.s32.totalorder %s10, 3
    %p135 = pnand %p133, %p134
    %p136 = pneg %p135
    // Predicated region
    $region9: #{densenet_pallas.1} parent=5 // pred_check
      _
    $region10: #{densenet_pallas.1} parent=5 // pred_check_branch
      %138 = sbr.rel (%p135) target = $region12
    $region11: #{densenet_pallas.1} parent=5 // pred_region
      %s139 = ssub.s32 %s10, 1
      // Predicated region
      $region13: #{densenet_pallas.1} parent=11 // pred_check
        %p140 = pneg %p57
      $region14: #{densenet_pallas.1} parent=11 // pred_check_branch
        %142 = sbr.rel (%p140) target = $region16
      $region15: #{densenet_pallas.1} parent=11 // pred_region
        _
      $region16: #{densenet_pallas.1} parent=11 // pred_fallthru
        _
      // Predicated region
      $region17: #{densenet_pallas.1} parent=11 // pred_check
        %p143 = pneg %p78
      $region18: #{densenet_pallas.1} parent=11 // pred_check_branch
        %145 = sbr.rel (%p143) target = $region20
      $region19: #{densenet_pallas.1} parent=11 // pred_region
        _
      $region20: #{densenet_pallas.1} parent=11 // pred_fallthru
        _
      // Predicated region
      $region21: #{densenet_pallas.1} parent=11 // pred_check
        %p146 = pneg %p99
      $region22: #{densenet_pallas.1} parent=11 // pred_check_branch
        %148 = sbr.rel (%p146) target = $region24
      $region23: #{densenet_pallas.1} parent=11 // pred_region
        _
      $region24: #{densenet_pallas.1} parent=11 // pred_fallthru
        _
    $region12: #{densenet_pallas.1} parent=5 // pred_fallthru
      _
    %p149 = scmp.lt.s32.totalorder %s10, 2
    // Predicated region
    $region25: #{densenet_pallas.1} parent=5 // pred_check
      %p150 = pneg %p149
    $region26: #{densenet_pallas.1} parent=5 // pred_check_branch
      %152 = sbr.rel (%p150) target = $region28
    $region27: #{densenet_pallas.1} parent=5 // pred_region
      // Predicated region
      $region29: #{densenet_pallas.1} parent=27 // pred_check
        %p153 = pneg %p30
      $region30: #{densenet_pallas.1} parent=27 // pred_check_branch
        %155 = sbr.rel (%p153) target = $region32
      $region31: #{densenet_pallas.1} parent=27 // pred_region
        %p156 = scmp.lt.s32.totalorder %s10, 1
        %s157 = scalar_select %p156, %s10, 1
        %s158 = smul.addr %s157, 2
        %s159 = smul.addr %s158, 8
        %s160 = scalar_lea.vmem %s0, %s159
      $region32: #{densenet_pallas.1} parent=27 // pred_fallthru
        _
    $region28: #{densenet_pallas.1} parent=5 // pred_fallthru
      _
    %p161 = scmp.le.s32.totalorder 1, %s10
    %p162 = scmp.lt.s32.totalorder %s10, 3
    %p163 = pnand %p161, %p162
    %p164 = pneg %p163
    // Predicated region
    $region33: #{densenet_pallas.1} parent=5 // pred_check
      _
    $region34: #{densenet_pallas.1} parent=5 // pred_check_branch
      %166 = sbr.rel (%p163) target = $region36
    $region35: #{densenet_pallas.1} parent=5 // pred_region
      %s167 = ssub.s32 %s10, 1
      %p168 = scmp.lt.s32.totalorder %s15, 1
      %s169 = scalar_select %p168, %s15, 1
      %s170 = smul.addr %s169, 2
      %s171 = smul.addr %s170, 8
      %s172 = scalar_lea.vmem %s0, %s171
      %p173 = pneg %p36
      %p174 = pneg %p33
      %p175 = pneg %p57
      %p176 = pneg %p54
      %p177 = pneg %p78
      %p178 = pneg %p75
      %p179 = pneg %p99
      %p180 = pneg %p96
      %p181 = pneg %p125
      %p182 = pneg %p122
      %p183 = scmp.lt.s32.totalorder %s15, 1
      %s184 = scalar_select %p183, %s15, 1
      %s185 = smul.addr %s184, 2
      %s186 = smul.addr %s185, 8
      %s187 = scalar_lea.vmem %s4, %s186
      %p188 = scmp.lt.s32.totalorder %s15, 1
      %s189 = scalar_select %p188, %s15, 1
      %s190 = smul.addr %s189, 2
      %s191 = smul.addr %s190, 8
      %s192 = scalar_lea.vmem %s0, %s191
      %p193 = scmp.lt.s32.totalorder %s15, 1
      %s194 = scalar_select %p193, %s15, 1
      %s195 = smul.addr %s194, 2
      %s196 = smul.addr %s195, 8
      %s197 = scalar_lea.vmem %s4, %s196
      %v198 = vld [vmem:[%s192] sm:$0xff]
      %v199 = vld [vmem:[%s192 + $0x8] sm:$0xff]
      %200 = vst [vmem:[#allocation2 + $0x30] sm:$0xff] %v198
      %201 = vst [vmem:[#allocation2 + $0x38] sm:$0xff] %v199
      %v202 = vld [vmem:[#allocation2 + $0x30] sm:$0xff]
      %v203 = vld [vmem:[#allocation2 + $0x38] sm:$0xff]
      %v204 = vld [vmem:[%s3] ss:$8 sm:$0x3]
      %205 = vrot.lane.b32.xlu0 %v202, 34
      %v206 = vpop.permute.xlu0 %205
      %207 = vrot.lane.b32.xlu0 %v203, 34
      %v208 = vpop.permute.xlu0 %207
      %v209 = vlaneseq
      %v210 = vand.u32 %v209, 127
      %vm211 = vcmp.lt.s32.totalorder %v210, 34
      %v212 = vsel %vm211, %v206, %v208
      %v213 = vsel %vm211, %v208, %v206
      %v215 = vlaneseq
      %v216 = vshrl.u32 %v215, 7
      %v217 = vsub.s32 0, %v216
      %v218 = vrot.slane %v204, %v217
      %v219 = vlaneseq
      %v220 = vshrl.u32 %v219, 7
      %v221 = vsub.s32 1, %v220
      %v222 = vrot.slane %v204, %v221
      %v225 = vmul.f32 %v213, %v218
      %v226 = vmul.f32 %v212, %v222
      %227 = vst [vmem:[#allocation3] sm:$0xff] %v225
      %228 = vst [vmem:[#allocation3 + $0x8] sm:$0xff] %v226
      %s229 = scalar_lea.vmem %s3, 1
      %v230 = vld [vmem:[%s229] ss:$8 sm:$0x3]
      %231 = vrot.lane.b32.xlu0 %v202, 33
      %v232 = vpop.permute.xlu0 %231
      %233 = vrot.lane.b32.xlu0 %v203, 33
      %v234 = vpop.permute.xlu0 %233
      %vm235 = vcmp.lt.s32.totalorder %v210, 33
      %v236 = vsel %vm235, %v232, %v234
      %v237 = vsel %vm235, %v234, %v232
      %v239 = vlaneseq
      %v240 = vshrl.u32 %v239, 7
      %v241 = vsub.s32 0, %v240
      %v242 = vrot.slane %v230, %v241
      %v243 = vlaneseq
      %v244 = vshrl.u32 %v243, 7
      %v245 = vsub.s32 1, %v244
      %v246 = vrot.slane %v230, %v245
      %v249 = vmul.f32 %v237, %v242
      %v250 = vmul.f32 %v236, %v246
      %251 = vst [vmem:[#allocation3 + $0x10] sm:$0xff] %v249
      %252 = vst [vmem:[#allocation3 + $0x18] sm:$0xff] %v250
      %s253 = scalar_lea.vmem %s3, 2
      %v254 = vld [vmem:[%s253] ss:$8 sm:$0x3]
      %255 = vrot.lane.b32.xlu0 %v202, 32
      %v256 = vpop.permute.xlu0 %255
      %257 = vrot.lane.b32.xlu0 %v203, 32
      %v258 = vpop.permute.xlu0 %257
      %vm259 = vcmp.lt.s32.totalorder %v210, 32
      %v260 = vsel %vm259, %v256, %v258
      %v261 = vsel %vm259, %v258, %v256
      %v263 = vlaneseq
      %v264 = vshrl.u32 %v263, 7
      %v265 = vsub.s32 0, %v264
      %v266 = vrot.slane %v254, %v265
      %v267 = vlaneseq
      %v268 = vshrl.u32 %v267, 7
      %v269 = vsub.s32 1, %v268
      %v270 = vrot.slane %v254, %v269
      %v273 = vmul.f32 %v261, %v266
      %v274 = vmul.f32 %v260, %v270
      %275 = vst [vmem:[#allocation3 + $0x20] sm:$0xff] %v273
      %276 = vst [vmem:[#allocation3 + $0x28] sm:$0xff] %v274
      %s277 = scalar_lea.vmem %s3, 3
      %v278 = vld [vmem:[%s277] ss:$8 sm:$0x3]
      %279 = vrot.lane.b32.xlu0 %v202, 18
      %v280 = vpop.permute.xlu0 %279
      %281 = vrot.lane.b32.xlu0 %v203, 18
      %v282 = vpop.permute.xlu0 %281
      %vm283 = vcmp.lt.s32.totalorder %v210, 18
      %v284 = vsel %vm283, %v280, %v282
      %v285 = vsel %vm283, %v282, %v280
      %v287 = vlaneseq
      %v288 = vshrl.u32 %v287, 7
      %v289 = vsub.s32 0, %v288
      %v290 = vrot.slane %v278, %v289
      %v291 = vlaneseq
      %v292 = vshrl.u32 %v291, 7
      %v293 = vsub.s32 1, %v292
      %v294 = vrot.slane %v278, %v293
      %v297 = vmul.f32 %v285, %v290
      %v298 = vmul.f32 %v284, %v294
      %299 = vst [vmem:[#allocation3 + $0x30] sm:$0xff] %v297
      %300 = vst [vmem:[#allocation3 + $0x38] sm:$0xff] %v298
      %s301 = scalar_lea.vmem %s3, 4
      %v302 = vld [vmem:[%s301] ss:$8 sm:$0x3]
      %303 = vrot.lane.b32.xlu0 %v202, 17
      %v304 = vpop.permute.xlu0 %303
      %305 = vrot.lane.b32.xlu0 %v203, 17
      %v306 = vpop.permute.xlu0 %305
      %vm307 = vcmp.lt.s32.totalorder %v210, 17
      %v308 = vsel %vm307, %v304, %v306
      %v309 = vsel %vm307, %v306, %v304
      %v311 = vlaneseq
      %v312 = vshrl.u32 %v311, 7
      %v313 = vsub.s32 0, %v312
      %v314 = vrot.slane %v302, %v313
      %v315 = vlaneseq
      %v316 = vshrl.u32 %v315, 7
      %v317 = vsub.s32 1, %v316
      %v318 = vrot.slane %v302, %v317
      %v321 = vmul.f32 %v309, %v314
      %v322 = vmul.f32 %v308, %v318
      %323 = vst [vmem:[#allocation3 + $0x40] sm:$0xff] %v321
      %324 = vst [vmem:[#allocation3 + $0x48] sm:$0xff] %v322
      %s325 = scalar_lea.vmem %s3, 5
      %v326 = vld [vmem:[%s325] ss:$8 sm:$0x3]
      %327 = vrot.lane.b32.xlu0 %v202, 16
      %v328 = vpop.permute.xlu0 %327
      %329 = vrot.lane.b32.xlu0 %v203, 16
      %v330 = vpop.permute.xlu0 %329
      %vm331 = vcmp.lt.s32.totalorder %v210, 16
      %v332 = vsel %vm331, %v328, %v330
      %v333 = vsel %vm331, %v330, %v328
      %v335 = vlaneseq
      %v336 = vshrl.u32 %v335, 7
      %v337 = vsub.s32 0, %v336
      %v338 = vrot.slane %v326, %v337
      %v339 = vlaneseq
      %v340 = vshrl.u32 %v339, 7
      %v341 = vsub.s32 1, %v340
      %v342 = vrot.slane %v326, %v341
      %v345 = vmul.f32 %v333, %v338
      %v346 = vmul.f32 %v332, %v342
      %347 = vst [vmem:[#allocation3 + $0x50] sm:$0xff] %v345
      %348 = vst [vmem:[#allocation3 + $0x58] sm:$0xff] %v346
      %s349 = scalar_lea.vmem %s3, 6
      %v350 = vld [vmem:[%s349] ss:$8 sm:$0x3]
      %351 = vrot.lane.b32.xlu0 %v202, 2
      %v352 = vpop.permute.xlu0 %351
      %353 = vrot.lane.b32.xlu0 %v203, 2
      %v354 = vpop.permute.xlu0 %353
      %vm355 = vcmp.lt.s32.totalorder %v210, 2
      %v356 = vsel %vm355, %v352, %v354
      %v357 = vsel %vm355, %v354, %v352
      %v359 = vlaneseq
      %v360 = vshrl.u32 %v359, 7
      %v361 = vsub.s32 0, %v360
      %v362 = vrot.slane %v350, %v361
      %v363 = vlaneseq
      %v364 = vshrl.u32 %v363, 7
      %v365 = vsub.s32 1, %v364
      %v366 = vrot.slane %v350, %v365
      %v369 = vmul.f32 %v357, %v362
      %v370 = vmul.f32 %v356, %v366
      %371 = vst [vmem:[#allocation3 + $0x60] sm:$0xff] %v369
      %372 = vst [vmem:[#allocation3 + $0x68] sm:$0xff] %v370
      %s373 = scalar_lea.vmem %s3, 7
      %v374 = vld [vmem:[%s373] ss:$8 sm:$0x3]
      %375 = vrot.lane.b32.xlu0 %v202, 1
      %v376 = vpop.permute.xlu0 %375
      %377 = vrot.lane.b32.xlu0 %v203, 1
      %v378 = vpop.permute.xlu0 %377
      %vm379 = vcmp.lt.s32.totalorder %v210, 1
      %v380 = vsel %vm379, %v376, %v378
      %v381 = vsel %vm379, %v378, %v376
      %v383 = vlaneseq
      %v384 = vshrl.u32 %v383, 7
      %v385 = vsub.s32 0, %v384
      %v386 = vrot.slane %v374, %v385
      %v387 = vlaneseq
      %v388 = vshrl.u32 %v387, 7
      %v389 = vsub.s32 1, %v388
      %v390 = vrot.slane %v374, %v389
      %v393 = vmul.f32 %v381, %v386
      %v394 = vmul.f32 %v380, %v390
      %395 = vst [vmem:[#allocation3 + $0x70] sm:$0xff] %v393
      %396 = vst [vmem:[#allocation3 + $0x78] sm:$0xff] %v394
      %397 = vst [vmem:[#allocation3 + $0x80] sm:$0xff] %v202
      %398 = vst [vmem:[#allocation3 + $0x88] sm:$0xff] %v203
      %v399 = vld [vmem:[%s1] sm:$0xff]
      %v400 = vld [vmem:[#allocation3] sm:$0xff]
      %v401 = vld [vmem:[#allocation3 + $0x8] sm:$0xff]
      %v402 = vld [vmem:[#allocation3 + $0x10] sm:$0xff]
      %v403 = vld [vmem:[#allocation3 + $0x18] sm:$0xff]
      %v404 = vld [vmem:[#allocation3 + $0x20] sm:$0xff]
      %v405 = vld [vmem:[#allocation3 + $0x28] sm:$0xff]
      %v406 = vld [vmem:[#allocation3 + $0x30] sm:$0xff]
      %v407 = vld [vmem:[#allocation3 + $0x38] sm:$0xff]
      %v408 = vld [vmem:[#allocation3 + $0x40] sm:$0xff]
      %v409 = vld [vmem:[#allocation3 + $0x48] sm:$0xff]
      %v410 = vld [vmem:[#allocation3 + $0x50] sm:$0xff]
      %v411 = vld [vmem:[#allocation3 + $0x58] sm:$0xff]
      %v412 = vld [vmem:[#allocation3 + $0x60] sm:$0xff]
      %v413 = vld [vmem:[#allocation3 + $0x68] sm:$0xff]
      %v414 = vld [vmem:[#allocation3 + $0x70] sm:$0xff]
      %v415 = vld [vmem:[#allocation3 + $0x78] sm:$0xff]
      %v416 = vld [vmem:[#allocation3 + $0x80] sm:$0xff]
      %v417 = vld [vmem:[#allocation3 + $0x88] sm:$0xff]
      %vm418 = vcmask 588800
      %v420 = vsel %vm418, %v399, 0
      %422 = vmatprep.subr.mxu0 0.0
      %423 = vmatpush1.msra.mxu0 0.0
      %424 = vmatprep.subr.mxu0 0.0
      %425 = vmatpush1.msra.mxu0 0.0
      %426 = vmatprep.subr.mxu0 0.0
      %427 = vmatpush1.msra.mxu0 0.0
      %428 = vmatprep.subr.mxu0 0.0
      %429 = vmatpush1.msra.mxu0 0.0
      %430 = vmatprep.subr.mxu0 0.0
      %431 = vmatpush1.msra.mxu0 0.0
      %432 = vmatprep.subr.mxu0 0.0
      %433 = vmatpush1.msra.mxu0 0.0
      %434 = vmatprep.subr.mxu0 0.0
      %435 = vmatpush1.msra.mxu0 0.0
      %436 = vmatprep.subr.mxu0 %v417
      %437 = vmatpush1.msra.mxu0 %v416
      %438 = vmatprep.subr.mxu0 %v415
      %439 = vmatpush1.msra.mxu0 %v414
      %440 = vmatprep.subr.mxu0 %v413
      %441 = vmatpush1.msra.mxu0 %v412
      %442 = vmatprep.subr.mxu0 %v411
      %443 = vmatpush1.msra.mxu0 %v410
      %444 = vmatprep.subr.mxu0 %v409
      %445 = vmatpush1.msra.mxu0 %v408
      %446 = vmatprep.subr.mxu0 %v407
      %447 = vmatpush1.msra.mxu0 %v406
      %448 = vmatprep.subr.mxu0 %v405
      %449 = vmatpush1.msra.mxu0 %v404
      %450 = vmatprep.subr.mxu0 %v403
      %451 = vmatpush1.msra.mxu0 %v402
      %452 = vmatprep.subr.mxu0 %v401
      %453 = vmatpush1.msra.mxu0 %v400
      %454 = vmatprep.subr.mxu0 0.0
      %455 = vmatpush2.msra.mxu0 0.0
      %456 = vmatprep.subr.mxu0 0.0
      %457 = vmatpush2.msra.mxu0 0.0
      %458 = vmatprep.subr.mxu0 0.0
      %459 = vmatpush2.msra.mxu0 0.0
      %460 = vmatprep.subr.mxu0 0.0
      %461 = vmatpush2.msra.mxu0 0.0
      %462 = vmatprep.subr.mxu0 0.0
      %463 = vmatpush2.msra.mxu0 0.0
      %464 = vmatprep.subr.mxu0 0.0
      %465 = vmatpush2.msra.mxu0 0.0
      %466 = vmatprep.subr.mxu0 0.0
      %467 = vmatpush2.msra.mxu0 0.0
      %468 = vmatprep.subr.mxu0 0.0
      %469 = vmatpush2.msra.mxu0 0.0
      %470 = vmatprep.subr.mxu0 0.0
      %471 = vmatpush2.msra.mxu0 0.0
      %472 = vmatprep.subr.mxu0 0.0
      %473 = vmatpush2.msra.mxu0 0.0
      %474 = vmatprep.subr.mxu0 0.0
      %475 = vmatpush2.msra.mxu0 0.0
      %476 = vmatprep.subr.mxu0 0.0
      %477 = vmatpush2.msra.mxu0 0.0
      %478 = vmatprep.subr.mxu0 0.0
      %479 = vmatpush2.msra.mxu0 0.0
      %480 = vmatprep.subr.mxu0 0.0
      %481 = vmatpush2.msra.mxu0 0.0
      %482 = vmatprep.subr.mxu0 0.0
      %483 = vmatpush2.msra.mxu0 0.0
      %484 = vmatprep.subr.mxu0 0.0
      %485 = vmatpush2.msra.mxu0 0.0
      %486 = vmatprep.mubr.f32.mxu0 0.0
      %487 = vmatmul.mubr.f32.gmra.mxu0 %v420
      %v488 = vpop.f32.mrf.mxu0
      %v489 = vadd.f32 0.0, %v488
      %v490 = vpop.f32.mrf.mxu0
      %v491 = vadd.f32 0.0, %v490
      %492 = vdwg.mxu0
      %v493 = vadd.f32 %v489, %v491
      %494 = vadd.xlane.f32.xlu0 %v493
      %v495 = vpop.xlane.xlu0 %494
      %v496 = vmul.f32 %v489, %v489
      %v497 = vmul.f32 %v491, %v491
      %v498 = vadd.f32 %v496, %v497
      %499 = vadd.xlane.f32.xlu0 %v498
      %v500 = vpop.xlane.xlu0 %499
      %v501 = vmul.f32 %v495, 0.00390625
      %v502 = vmul.f32 %v500, 0.00390625
      %v503 = vmul.f32 %v501, %v501
      %v504 = vsub.f32 %v502, %v503
      %v505 = vmax.f32 %v504, 0.0
      %v506 = vsub.f32 %v489, %v501
      %v507 = vsub.f32 %v491, %v501
      %v508 = vadd.f32 %v505, 1e-05
      %v509 = vrsqrt.pop %v508
      %v510 = vmul.f32 %v506, %v509
      %v511 = vmul.f32 %v507, %v509
      %vm512 = vcmp.gt.f32.partialorder %v510, 0.0
      %vm513 = vcmp.gt.f32.partialorder %v511, 0.0
      %v514 = vld [vmem:[%s2] sm:$0xff]
      %516 = vset.pattern.permute.xlu0 0
      %517 = vperm.xlu0 %516, %v514
      %v518 = vpop.permute.xlu0 %517
      %v520 = vmul.f32 %v518, %v510
      %v521 = vmul.f32 %v518, %v511
      %v522 = vsel %vm512, %v510, %v520
      %v523 = vsel %vm513, %v511, %v521
      %524 = vst [vmem:[#allocation2 + $0x20] sm:$0xff] %v522
      %525 = vst [vmem:[#allocation2 + $0x28] sm:$0xff] %v523
      %v526 = vld [vmem:[#allocation2 + $0x20] sm:$0xff]
      %v527 = vld [vmem:[#allocation2 + $0x28] sm:$0xff]
      %v528 = vld [vmem:[#allocation2 + $0x30] sm:$0xff]
      %v529 = vld [vmem:[#allocation2 + $0x38] sm:$0xff]
      %s530 = scalar_lea.vmem %s3, 17
      %v531 = vld [vmem:[%s530] ss:$8 sm:$0x3]
      %532 = vrot.lane.b32.xlu0 %v526, 66
      %v533 = vpop.permute.xlu0 %532
      %534 = vrot.lane.b32.xlu0 %v528, 66
      %v535 = vpop.permute.xlu0 %534
      %536 = vrot.lane.b32.xlu0 %v527, 66
      %v537 = vpop.permute.xlu0 %536
      %538 = vrot.lane.b32.xlu0 %v529, 66
      %v539 = vpop.permute.xlu0 %538
      %vm540 = vcmp.lt.s32.totalorder %v210, 66
      %v541 = vsel %vm540, %v533, %v537
      %v542 = vsel %vm540, %v535, %v539
      %v543 = vsel %vm540, %v537, %v533
      %v544 = vsel %vm540, %v539, %v535
      %v546 = vlaneseq
      %v547 = vshrl.u32 %v546, 7
      %v548 = vsub.s32 0, %v547
      %v549 = vrot.slane %v531, %v548
      %v550 = vlaneseq
      %v551 = vshrl.u32 %v550, 7
      %v552 = vsub.s32 1, %v551
      %v553 = vrot.slane %v531, %v552
      %v556 = vmul.f32 %v543, %v549
      %v557 = vmul.f32 %v541, %v553
      %v558 = vmul.f32 %v544, %v549
      %v559 = vmul.f32 %v542, %v553
      %560 = vst [vmem:[#allocation3] sm:$0xff] %v556
      %561 = vst [vmem:[#allocation3 + $0x8] sm:$0xff] %v557
      %562 = vst [vmem:[#allocation3 + $0x10] sm:$0xff] %v558
      %563 = vst [vmem:[#allocation3 + $0x18] sm:$0xff] %v559
      %s564 = scalar_lea.vmem %s3, 18
      %v565 = vld [vmem:[%s564] ss:$8 sm:$0x3]
      %566 = vrot.lane.b32.xlu0 %v526, 65
      %v567 = vpop.permute.xlu0 %566
      %568 = vrot.lane.b32.xlu0 %v528, 65
      %v569 = vpop.permute.xlu0 %568
      %570 = vrot.lane.b32.xlu0 %v527, 65
      %v571 = vpop.permute.xlu0 %570
      %572 = vrot.lane.b32.xlu0 %v529, 65
      %v573 = vpop.permute.xlu0 %572
      %vm574 = vcmp.lt.s32.totalorder %v210, 65
      %v575 = vsel %vm574, %v567, %v571
      %v576 = vsel %vm574, %v569, %v573
      %v577 = vsel %vm574, %v571, %v567
      %v578 = vsel %vm574, %v573, %v569
      %v580 = vlaneseq
      %v581 = vshrl.u32 %v580, 7
      %v582 = vsub.s32 0, %v581
      %v583 = vrot.slane %v565, %v582
      %v584 = vlaneseq
      %v585 = vshrl.u32 %v584, 7
      %v586 = vsub.s32 1, %v585
      %v587 = vrot.slane %v565, %v586
      %v590 = vmul.f32 %v577, %v583
      %v591 = vmul.f32 %v575, %v587
      %v592 = vmul.f32 %v578, %v583
      %v593 = vmul.f32 %v576, %v587
      %594 = vst [vmem:[#allocation3 + $0x20] sm:$0xff] %v590
      %595 = vst [vmem:[#allocation3 + $0x28] sm:$0xff] %v591
      %596 = vst [vmem:[#allocation3 + $0x30] sm:$0xff] %v592
      %597 = vst [vmem:[#allocation3 + $0x38] sm:$0xff] %v593
      %s598 = scalar_lea.vmem %s3, 19
      %v599 = vld [vmem:[%s598] ss:$8 sm:$0x3]
      %600 = vrot.lane.b32.xlu0 %v526, 64
      %v601 = vpop.permute.xlu0 %600
      %602 = vrot.lane.b32.xlu0 %v528, 64
      %v603 = vpop.permute.xlu0 %602
      %604 = vrot.lane.b32.xlu0 %v527, 64
      %v605 = vpop.permute.xlu0 %604
      %606 = vrot.lane.b32.xlu0 %v529, 64
      %v607 = vpop.permute.xlu0 %606
      %vm608 = vcmp.lt.s32.totalorder %v210, 64
      %v609 = vsel %vm608, %v601, %v605
      %v610 = vsel %vm608, %v603, %v607
      %v611 = vsel %vm608, %v605, %v601
      %v612 = vsel %vm608, %v607, %v603
      %v614 = vlaneseq
      %v615 = vshrl.u32 %v614, 7
      %v616 = vsub.s32 0, %v615
      %v617 = vrot.slane %v599, %v616
      %v618 = vlaneseq
      %v619 = vshrl.u32 %v618, 7
      %v620 = vsub.s32 1, %v619
      %v621 = vrot.slane %v599, %v620
      %v624 = vmul.f32 %v611, %v617
      %v625 = vmul.f32 %v609, %v621
      %v626 = vmul.f32 %v612, %v617
      %v627 = vmul.f32 %v610, %v621
      %628 = vst [vmem:[#allocation3 + $0x40] sm:$0xff] %v624
      %629 = vst [vmem:[#allocation3 + $0x48] sm:$0xff] %v625
      %630 = vst [vmem:[#allocation3 + $0x50] sm:$0xff] %v626
      %631 = vst [vmem:[#allocation3 + $0x58] sm:$0xff] %v627
      %s632 = scalar_lea.vmem %s3, 20
      %v633 = vld [vmem:[%s632] ss:$8 sm:$0x3]
      %634 = vrot.lane.b32.xlu0 %v526, 34
      %v635 = vpop.permute.xlu0 %634
      %636 = vrot.lane.b32.xlu0 %v528, 34
      %v637 = vpop.permute.xlu0 %636
      %638 = vrot.lane.b32.xlu0 %v527, 34
      %v639 = vpop.permute.xlu0 %638
      %640 = vrot.lane.b32.xlu0 %v529, 34
      %v641 = vpop.permute.xlu0 %640
      %v642 = vsel %vm211, %v635, %v639
      %v643 = vsel %vm211, %v637, %v641
      %v644 = vsel %vm211, %v639, %v635
      %v645 = vsel %vm211, %v641, %v637
      %v647 = vlaneseq
      %v648 = vshrl.u32 %v647, 7
      %v649 = vsub.s32 0, %v648
      %v650 = vrot.slane %v633, %v649
      %v651 = vlaneseq
      %v652 = vshrl.u32 %v651, 7
      %v653 = vsub.s32 1, %v652
      %v654 = vrot.slane %v633, %v653
      %v657 = vmul.f32 %v644, %v650
      %v658 = vmul.f32 %v642, %v654
      %v659 = vmul.f32 %v645, %v650
      %v660 = vmul.f32 %v643, %v654
      %661 = vst [vmem:[#allocation3 + $0x60] sm:$0xff] %v657
      %662 = vst [vmem:[#allocation3 + $0x68] sm:$0xff] %v658
      %663 = vst [vmem:[#allocation3 + $0x70] sm:$0xff] %v659
      %664 = vst [vmem:[#allocation3 + $0x78] sm:$0xff] %v660
      %s665 = scalar_lea.vmem %s3, 21
      %v666 = vld [vmem:[%s665] ss:$8 sm:$0x3]
      %667 = vrot.lane.b32.xlu0 %v526, 33
      %v668 = vpop.permute.xlu0 %667
      %669 = vrot.lane.b32.xlu0 %v528, 33
      %v670 = vpop.permute.xlu0 %669
      %671 = vrot.lane.b32.xlu0 %v527, 33
      %v672 = vpop.permute.xlu0 %671
      %673 = vrot.lane.b32.xlu0 %v529, 33
      %v674 = vpop.permute.xlu0 %673
      %v675 = vsel %vm235, %v668, %v672
      %v676 = vsel %vm235, %v670, %v674
      %v677 = vsel %vm235, %v672, %v668
      %v678 = vsel %vm235, %v674, %v670
      %v680 = vlaneseq
      %v681 = vshrl.u32 %v680, 7
      %v682 = vsub.s32 0, %v681
      %v683 = vrot.slane %v666, %v682
      %v684 = vlaneseq
      %v685 = vshrl.u32 %v684, 7
      %v686 = vsub.s32 1, %v685
      %v687 = vrot.slane %v666, %v686
      %v690 = vmul.f32 %v677, %v683
      %v691 = vmul.f32 %v675, %v687
      %v692 = vmul.f32 %v678, %v683
      %v693 = vmul.f32 %v676, %v687
      %694 = vst [vmem:[#allocation3 + $0x80] sm:$0xff] %v690
      %695 = vst [vmem:[#allocation3 + $0x88] sm:$0xff] %v691
      %696 = vst [vmem:[#allocation3 + $0x90] sm:$0xff] %v692
      %697 = vst [vmem:[#allocation3 + $0x98] sm:$0xff] %v693
      %s698 = scalar_lea.vmem %s3, 22
      %v699 = vld [vmem:[%s698] ss:$8 sm:$0x3]
      %700 = vrot.lane.b32.xlu0 %v526, 32
      %v701 = vpop.permute.xlu0 %700
      %702 = vrot.lane.b32.xlu0 %v528, 32
      %v703 = vpop.permute.xlu0 %702
      %704 = vrot.lane.b32.xlu0 %v527, 32
      %v705 = vpop.permute.xlu0 %704
      %706 = vrot.lane.b32.xlu0 %v529, 32
      %v707 = vpop.permute.xlu0 %706
      %v708 = vsel %vm259, %v701, %v705
      %v709 = vsel %vm259, %v703, %v707
      %v710 = vsel %vm259, %v705, %v701
      %v711 = vsel %vm259, %v707, %v703
      %v713 = vlaneseq
      %v714 = vshrl.u32 %v713, 7
      %v715 = vsub.s32 0, %v714
      %v716 = vrot.slane %v699, %v715
      %v717 = vlaneseq
      %v718 = vshrl.u32 %v717, 7
      %v719 = vsub.s32 1, %v718
      %v720 = vrot.slane %v699, %v719
      %v723 = vmul.f32 %v710, %v716
      %v724 = vmul.f32 %v708, %v720
      %v725 = vmul.f32 %v711, %v716
      %v726 = vmul.f32 %v709, %v720
      %727 = vst [vmem:[#allocation3 + $0xa0] sm:$0xff] %v723
      %728 = vst [vmem:[#allocation3 + $0xa8] sm:$0xff] %v724
      %729 = vst [vmem:[#allocation3 + $0xb0] sm:$0xff] %v725
      %730 = vst [vmem:[#allocation3 + $0xb8] sm:$0xff] %v726
      %s731 = scalar_lea.vmem %s3, 23
      %v732 = vld [vmem:[%s731] ss:$8 sm:$0x3]
      %733 = vrot.lane.b32.xlu0 %v526, 2
      %v734 = vpop.permute.xlu0 %733
      %735 = vrot.lane.b32.xlu0 %v528, 2
      %v736 = vpop.permute.xlu0 %735
      %737 = vrot.lane.b32.xlu0 %v527, 2
      %v738 = vpop.permute.xlu0 %737
      %739 = vrot.lane.b32.xlu0 %v529, 2
      %v740 = vpop.permute.xlu0 %739
      %v741 = vsel %vm355, %v734, %v738
      %v742 = vsel %vm355, %v736, %v740
      %v743 = vsel %vm355, %v738, %v734
      %v744 = vsel %vm355, %v740, %v736
      %v746 = vlaneseq
      %v747 = vshrl.u32 %v746, 7
      %v748 = vsub.s32 0, %v747
      %v749 = vrot.slane %v732, %v748
      %v750 = vlaneseq
      %v751 = vshrl.u32 %v750, 7
      %v752 = vsub.s32 1, %v751
      %v753 = vrot.slane %v732, %v752
      %v756 = vmul.f32 %v743, %v749
      %v757 = vmul.f32 %v741, %v753
      %v758 = vmul.f32 %v744, %v749
      %v759 = vmul.f32 %v742, %v753
      %760 = vst [vmem:[#allocation3 + $0xc0] sm:$0xff] %v756
      %761 = vst [vmem:[#allocation3 + $0xc8] sm:$0xff] %v757
      %762 = vst [vmem:[#allocation3 + $0xd0] sm:$0xff] %v758
      %763 = vst [vmem:[#allocation3 + $0xd8] sm:$0xff] %v759
      %s764 = scalar_lea.vmem %s3, 32
      %v765 = vld [vmem:[%s764] ss:$8 sm:$0x3]
      %766 = vrot.lane.b32.xlu0 %v526, 1
      %v767 = vpop.permute.xlu0 %766
      %768 = vrot.lane.b32.xlu0 %v528, 1
      %v769 = vpop.permute.xlu0 %768
      %770 = vrot.lane.b32.xlu0 %v527, 1
      %v771 = vpop.permute.xlu0 %770
      %772 = vrot.lane.b32.xlu0 %v529, 1
      %v773 = vpop.permute.xlu0 %772
      %v774 = vsel %vm379, %v767, %v771
      %v775 = vsel %vm379, %v769, %v773
      %v776 = vsel %vm379, %v771, %v767
      %v777 = vsel %vm379, %v773, %v769
      %v779 = vlaneseq
      %v780 = vshrl.u32 %v779, 7
      %v781 = vsub.s32 0, %v780
      %v782 = vrot.slane %v765, %v781
      %v783 = vlaneseq
      %v784 = vshrl.u32 %v783, 7
      %v785 = vsub.s32 1, %v784
      %v786 = vrot.slane %v765, %v785
      %v789 = vmul.f32 %v776, %v782
      %v790 = vmul.f32 %v774, %v786
      %v791 = vmul.f32 %v777, %v782
      %v792 = vmul.f32 %v775, %v786
      %793 = vst [vmem:[#allocation3 + $0xe0] sm:$0xff] %v789
      %794 = vst [vmem:[#allocation3 + $0xe8] sm:$0xff] %v790
      %795 = vst [vmem:[#allocation3 + $0xf0] sm:$0xff] %v791
      %796 = vst [vmem:[#allocation3 + $0xf8] sm:$0xff] %v792
      %797 = vst [vmem:[#allocation3 + $0x100] sm:$0xff] %v526
      %798 = vst [vmem:[#allocation3 + $0x108] sm:$0xff] %v527
      %799 = vst [vmem:[#allocation3 + $0x110] sm:$0xff] %v528
      %800 = vst [vmem:[#allocation3 + $0x118] sm:$0xff] %v529
      %s801 = scalar_lea.vmem %s1, 16
      %v802 = vld [vmem:[%s801] sm:$0xff]
      %v803 = vld [vmem:[%s801 + $0x8] sm:$0xff]
      %v804 = vld [vmem:[#allocation3] sm:$0xff]
      %v805 = vld [vmem:[#allocation3 + $0x8] sm:$0xff]
      %v806 = vld [vmem:[#allocation3 + $0x10] sm:$0xff]
      %v807 = vld [vmem:[#allocation3 + $0x18] sm:$0xff]
      %v808 = vld [vmem:[#allocation3 + $0x20] sm:$0xff]
      %v809 = vld [vmem:[#allocation3 + $0x28] sm:$0xff]
      %v810 = vld [vmem:[#allocation3 + $0x30] sm:$0xff]
      %v811 = vld [vmem:[#allocation3 + $0x38] sm:$0xff]
      %v812 = vld [vmem:[#allocation3 + $0x40] sm:$0xff]
      %v813 = vld [vmem:[#allocation3 + $0x48] sm:$0xff]
      %v814 = vld [vmem:[#allocation3 + $0x50] sm:$0xff]
      %v815 = vld [vmem:[#allocation3 + $0x58] sm:$0xff]
      %v816 = vld [vmem:[#allocation3 + $0x60] sm:$0xff]
      %v817 = vld [vmem:[#allocation3 + $0x68] sm:$0xff]
      %v818 = vld [vmem:[#allocation3 + $0x70] sm:$0xff]
      %v819 = vld [vmem:[#allocation3 + $0x78] sm:$0xff]
      %v820 = vld [vmem:[#allocation3 + $0x80] sm:$0xff]
      %v821 = vld [vmem:[#allocation3 + $0x88] sm:$0xff]
      %v822 = vld [vmem:[#allocation3 + $0x90] sm:$0xff]
      %v823 = vld [vmem:[#allocation3 + $0x98] sm:$0xff]
      %v824 = vld [vmem:[#allocation3 + $0xa0] sm:$0xff]
      %v825 = vld [vmem:[#allocation3 + $0xa8] sm:$0xff]
      %v826 = vld [vmem:[#allocation3 + $0xb0] sm:$0xff]
      %v827 = vld [vmem:[#allocation3 + $0xb8] sm:$0xff]
      %v828 = vld [vmem:[#allocation3 + $0xc0] sm:$0xff]
      %v829 = vld [vmem:[#allocation3 + $0xc8] sm:$0xff]
      %v830 = vld [vmem:[#allocation3 + $0xd0] sm:$0xff]
      %v831 = vld [vmem:[#allocation3 + $0xd8] sm:$0xff]
      %v832 = vld [vmem:[#allocation3 + $0xe0] sm:$0xff]
      %v833 = vld [vmem:[#allocation3 + $0xe8] sm:$0xff]
      %v834 = vld [vmem:[#allocation3 + $0xf0] sm:$0xff]
      %v835 = vld [vmem:[#allocation3 + $0xf8] sm:$0xff]
      %v836 = vld [vmem:[#allocation3 + $0x100] sm:$0xff]
      %v837 = vld [vmem:[#allocation3 + $0x108] sm:$0xff]
      %v838 = vld [vmem:[#allocation3 + $0x110] sm:$0xff]
      %v839 = vld [vmem:[#allocation3 + $0x118] sm:$0xff]
      %vm840 = vcmask 130048
      %v842 = vsel %vm840, %v803, 0
      %844 = vmatprep.subr.mxu0 %v835
      %845 = vmatpush1.msra.mxu0 %v834
      %846 = vmatprep.subr.mxu0 %v833
      %847 = vmatpush1.msra.mxu0 %v832
      %848 = vmatprep.subr.mxu0 %v831
      %849 = vmatpush1.msra.mxu0 %v830
      %850 = vmatprep.subr.mxu0 %v829
      %851 = vmatpush1.msra.mxu0 %v828
      %852 = vmatprep.subr.mxu0 %v827
      %853 = vmatpush1.msra.mxu0 %v826
      %854 = vmatprep.subr.mxu0 %v825
      %855 = vmatpush1.msra.mxu0 %v824
      %856 = vmatprep.subr.mxu0 %v823
      %857 = vmatpush1.msra.mxu0 %v822
      %858 = vmatprep.subr.mxu0 %v821
      %859 = vmatpush1.msra.mxu0 %v820
      %860 = vmatprep.subr.mxu0 %v819
      %861 = vmatpush1.msra.mxu0 %v818
      %862 = vmatprep.subr.mxu0 %v817
      %863 = vmatpush1.msra.mxu0 %v816
      %864 = vmatprep.subr.mxu0 %v815
      %865 = vmatpush1.msra.mxu0 %v814
      %866 = vmatprep.subr.mxu0 %v813
      %867 = vmatpush1.msra.mxu0 %v812
      %868 = vmatprep.subr.mxu0 %v811
      %869 = vmatpush1.msra.mxu0 %v810
      %870 = vmatprep.subr.mxu0 %v809
      %871 = vmatpush1.msra.mxu0 %v808
      %872 = vmatprep.subr.mxu0 %v807
      %873 = vmatpush1.msra.mxu0 %v806
      %874 = vmatprep.subr.mxu0 %v805
      %875 = vmatpush1.msra.mxu0 %v804
      %876 = vmatprep.subr.mxu0 0.0
      %877 = vmatpush2.msra.mxu0 0.0
      %878 = vmatprep.subr.mxu0 0.0
      %879 = vmatpush2.msra.mxu0 0.0
      %880 = vmatprep.subr.mxu0 0.0
      %881 = vmatpush2.msra.mxu0 0.0
      %882 = vmatprep.subr.mxu0 0.0
      %883 = vmatpush2.msra.mxu0 0.0
      %884 = vmatprep.subr.mxu0 0.0
      %885 = vmatpush2.msra.mxu0 0.0
      %886 = vmatprep.subr.mxu0 0.0
      %887 = vmatpush2.msra.mxu0 0.0
      %888 = vmatprep.subr.mxu0 0.0
      %889 = vmatpush2.msra.mxu0 0.0
      %890 = vmatprep.subr.mxu0 0.0
      %891 = vmatpush2.msra.mxu0 0.0
      %892 = vmatprep.subr.mxu0 0.0
      %893 = vmatpush2.msra.mxu0 0.0
      %894 = vmatprep.subr.mxu0 0.0
      %895 = vmatpush2.msra.mxu0 0.0
      %896 = vmatprep.subr.mxu0 0.0
      %897 = vmatpush2.msra.mxu0 0.0
      %898 = vmatprep.subr.mxu0 0.0
      %899 = vmatpush2.msra.mxu0 0.0
      %900 = vmatprep.subr.mxu0 0.0
      %901 = vmatpush2.msra.mxu0 0.0
      %902 = vmatprep.subr.mxu0 0.0
      %903 = vmatpush2.msra.mxu0 0.0
      %904 = vmatprep.subr.mxu0 %v839
      %905 = vmatpush2.msra.mxu0 %v838
      %906 = vmatprep.subr.mxu0 %v837
      %907 = vmatpush2.msra.mxu0 %v836
      %908 = vmatprep.mubr.f32.mxu0 %v842
      %909 = vmatmul.mubr.f32.gmra.mxu0 %v802
      %v910 = vpop.f32.mrf.mxu0
      %v911 = vadd.f32 0.0, %v910
      %v912 = vpop.f32.mrf.mxu0
      %v913 = vadd.f32 0.0, %v912
      %914 = vdwg.mxu0
      %v915 = vadd.f32 %v911, %v913
      %916 = vadd.xlane.f32.xlu0 %v915
      %v917 = vpop.xlane.xlu0 %916
      %v918 = vmul.f32 %v911, %v911
      %v919 = vmul.f32 %v913, %v913
      %v920 = vadd.f32 %v918, %v919
      %921 = vadd.xlane.f32.xlu0 %v920
      %v922 = vpop.xlane.xlu0 %921
      %v923 = vmul.f32 %v917, 0.00390625
      %v924 = vmul.f32 %v922, 0.00390625
      %v925 = vmul.f32 %v923, %v923
      %v926 = vsub.f32 %v924, %v925
      %v927 = vmax.f32 %v926, 0.0
      %v928 = vsub.f32 %v911, %v923
      %v929 = vsub.f32 %v913, %v923
      %v930 = vadd.f32 %v927, 1e-05
      %v931 = vrsqrt.pop %v930
      %v932 = vmul.f32 %v928, %v931
      %v933 = vmul.f32 %v929, %v931
      %vm934 = vcmp.gt.f32.partialorder %v932, 0.0
      %vm935 = vcmp.gt.f32.partialorder %v933, 0.0
      %s936 = scalar_lea.vmem %s2, 8
      %v937 = vld [vmem:[%s936] sm:$0xff]
      %939 = vset.pattern.permute.xlu0 0
      %940 = vperm.xlu0 %939, %v937
      %v941 = vpop.permute.xlu0 %940
      %v943 = vmul.f32 %v941, %v932
      %v944 = vmul.f32 %v941, %v933
      %v945 = vsel %vm934, %v932, %v943
      %v946 = vsel %vm935, %v933, %v944
      %947 = vst [vmem:[#allocation2 + $0x10] sm:$0xff] %v945
      %948 = vst [vmem:[#allocation2 + $0x18] sm:$0xff] %v946
      %v949 = vld [vmem:[#allocation2 + $0x10] sm:$0xff]
      %v950 = vld [vmem:[#allocation2 + $0x18] sm:$0xff]
      %v951 = vld [vmem:[#allocation2 + $0x20] sm:$0xff]
      %v952 = vld [vmem:[#allocation2 + $0x28] sm:$0xff]
      %v953 = vld [vmem:[#allocation2 + $0x30] sm:$0xff]
      %v954 = vld [vmem:[#allocation2 + $0x38] sm:$0xff]
      %s955 = scalar_lea.vmem %s3, 34
      %v956 = vld [vmem:[%s955] ss:$8 sm:$0x3]
      %957 = vrot.lane.b32.xlu0 %v949, 2
      %v958 = vpop.permute.xlu0 %957
      %959 = vrot.lane.b32.xlu0 %v951, 2
      %v960 = vpop.permute.xlu0 %959
      %961 = vrot.lane.b32.xlu0 %v953, 2
      %v962 = vpop.permute.xlu0 %961
      %963 = vrot.lane.b32.xlu0 %v950, 2
      %v964 = vpop.permute.xlu0 %963
      %965 = vrot.lane.b32.xlu0 %v952, 2
      %v966 = vpop.permute.xlu0 %965
      %967 = vrot.lane.b32.xlu0 %v954, 2
      %v968 = vpop.permute.xlu0 %967
      %v969 = vsel %vm355, %v958, %v964
      %v970 = vsel %vm355, %v960, %v966
      %v971 = vsel %vm355, %v962, %v968
      %v972 = vsel %vm355, %v964, %v958
      %v973 = vsel %vm355, %v966, %v960
      %v974 = vsel %vm355, %v968, %v962
      %v976 = vlaneseq
      %v977 = vshrl.u32 %v976, 7
      %v978 = vsub.s32 0, %v977
      %v979 = vrot.slane %v956, %v978
      %v980 = vlaneseq
      %v981 = vshrl.u32 %v980, 7
      %v982 = vsub.s32 1, %v981
      %v983 = vrot.slane %v956, %v982
      %v986 = vmul.f32 %v969, %v979
      %v987 = vmul.f32 %v972, %v983
      %v988 = vmul.f32 %v970, %v979
      %v989 = vmul.f32 %v973, %v983
      %v990 = vmul.f32 %v971, %v979
      %v991 = vmul.f32 %v974, %v983
      %992 = vst [vmem:[#allocation3] sm:$0xff] %v986
      %993 = vst [vmem:[#allocation3 + $0x8] sm:$0xff] %v987
      %994 = vst [vmem:[#allocation3 + $0x10] sm:$0xff] %v988
      %995 = vst [vmem:[#allocation3 + $0x18] sm:$0xff] %v989
      %996 = vst [vmem:[#allocation3 + $0x20] sm:$0xff] %v990
      %997 = vst [vmem:[#allocation3 + $0x28] sm:$0xff] %v991
      %s998 = scalar_lea.vmem %s3, 35
      %v999 = vld [vmem:[%s998] ss:$8 sm:$0x3]
      %1000 = vrot.lane.b32.xlu0 %v949, 1
      %v1001 = vpop.permute.xlu0 %1000
      %1002 = vrot.lane.b32.xlu0 %v951, 1
      %v1003 = vpop.permute.xlu0 %1002
      %1004 = vrot.lane.b32.xlu0 %v953, 1
      %v1005 = vpop.permute.xlu0 %1004
      %1006 = vrot.lane.b32.xlu0 %v950, 1
      %v1007 = vpop.permute.xlu0 %1006
      %1008 = vrot.lane.b32.xlu0 %v952, 1
      %v1009 = vpop.permute.xlu0 %1008
      %1010 = vrot.lane.b32.xlu0 %v954, 1
      %v1011 = vpop.permute.xlu0 %1010
      %v1012 = vsel %vm379, %v1001, %v1007
      %v1013 = vsel %vm379, %v1003, %v1009
      %v1014 = vsel %vm379, %v1005, %v1011
      %v1015 = vsel %vm379, %v1007, %v1001
      %v1016 = vsel %vm379, %v1009, %v1003
      %v1017 = vsel %vm379, %v1011, %v1005
      %v1019 = vlaneseq
      %v1020 = vshrl.u32 %v1019, 7
      %v1021 = vsub.s32 0, %v1020
      %v1022 = vrot.slane %v999, %v1021
      %v1023 = vlaneseq
      %v1024 = vshrl.u32 %v1023, 7
      %v1025 = vsub.s32 1, %v1024
      %v1026 = vrot.slane %v999, %v1025
      %v1029 = vmul.f32 %v1012, %v1022
      %v1030 = vmul.f32 %v1015, %v1026
      %v1031 = vmul.f32 %v1013, %v1022
      %v1032 = vmul.f32 %v1016, %v1026
      %v1033 = vmul.f32 %v1014, %v1022
      %v1034 = vmul.f32 %v1017, %v1026
      %1035 = vst [vmem:[#allocation3 + $0x30] sm:$0xff] %v1029
      %1036 = vst [vmem:[#allocation3 + $0x38] sm:$0xff] %v1030
      %1037 = vst [vmem:[#allocation3 + $0x40] sm:$0xff] %v1031
      %1038 = vst [vmem:[#allocation3 + $0x48] sm:$0xff] %v1032
      %1039 = vst [vmem:[#allocation3 + $0x50] sm:$0xff] %v1033
      %1040 = vst [vmem:[#allocation3 + $0x58] sm:$0xff] %v1034
      %s1041 = scalar_lea.vmem %s3, 36
      %v1042 = vld [vmem:[%s1041] ss:$8 sm:$0x3]
      %v1044 = vlaneseq
      %v1045 = vshrl.u32 %v1044, 7
      %v1046 = vsub.s32 0, %v1045
      %v1047 = vrot.slane %v1042, %v1046
      %v1048 = vlaneseq
      %v1049 = vshrl.u32 %v1048, 7
      %v1050 = vsub.s32 1, %v1049
      %v1051 = vrot.slane %v1042, %v1050
      %v1054 = vmul.f32 %v950, %v1047
      %v1055 = vmul.f32 %v949, %v1051
      %v1056 = vmul.f32 %v952, %v1047
      %v1057 = vmul.f32 %v951, %v1051
      %v1058 = vmul.f32 %v954, %v1047
      %v1059 = vmul.f32 %v953, %v1051
      %1060 = vst [vmem:[#allocation3 + $0x60] sm:$0xff] %v1054
      %1061 = vst [vmem:[#allocation3 + $0x68] sm:$0xff] %v1055
      %1062 = vst [vmem:[#allocation3 + $0x70] sm:$0xff] %v1056
      %1063 = vst [vmem:[#allocation3 + $0x78] sm:$0xff] %v1057
      %1064 = vst [vmem:[#allocation3 + $0x80] sm:$0xff] %v1058
      %1065 = vst [vmem:[#allocation3 + $0x88] sm:$0xff] %v1059
      %s1066 = scalar_lea.vmem %s3, 37
      %v1067 = vld [vmem:[%s1066] ss:$8 sm:$0x3]
      %1068 = vrot.lane.b32.xlu0 %v949, 66
      %v1069 = vpop.permute.xlu0 %1068
      %1070 = vrot.lane.b32.xlu0 %v951, 66
      %v1071 = vpop.permute.xlu0 %1070
      %1072 = vrot.lane.b32.xlu0 %v953, 66
      %v1073 = vpop.permute.xlu0 %1072
      %1074 = vrot.lane.b32.xlu0 %v950, 66
      %v1075 = vpop.permute.xlu0 %1074
      %1076 = vrot.lane.b32.xlu0 %v952, 66
      %v1077 = vpop.permute.xlu0 %1076
      %1078 = vrot.lane.b32.xlu0 %v954, 66
      %v1079 = vpop.permute.xlu0 %1078
      %v1080 = vsel %vm540, %v1069, %v1075
      %v1081 = vsel %vm540, %v1071, %v1077
      %v1082 = vsel %vm540, %v1073, %v1079
      %v1083 = vsel %vm540, %v1075, %v1069
      %v1084 = vsel %vm540, %v1077, %v1071
      %v1085 = vsel %vm540, %v1079, %v1073
      %v1087 = vlaneseq
      %v1088 = vshrl.u32 %v1087, 7
      %v1089 = vsub.s32 0, %v1088
      %v1090 = vrot.slane %v1067, %v1089
      %v1091 = vlaneseq
      %v1092 = vshrl.u32 %v1091, 7
      %v1093 = vsub.s32 1, %v1092
      %v1094 = vrot.slane %v1067, %v1093
      %v1097 = vmul.f32 %v1083, %v1090
      %v1098 = vmul.f32 %v1080, %v1094
      %v1099 = vmul.f32 %v1084, %v1090
      %v1100 = vmul.f32 %v1081, %v1094
      %v1101 = vmul.f32 %v1085, %v1090
      %v1102 = vmul.f32 %v1082, %v1094
      %1103 = vst [vmem:[#allocation3 + $0x90] sm:$0xff] %v1097
      %1104 = vst [vmem:[#allocation3 + $0x98] sm:$0xff] %v1098
      %1105 = vst [vmem:[#allocation3 + $0xa0] sm:$0xff] %v1099
      %1106 = vst [vmem:[#allocation3 + $0xa8] sm:$0xff] %v1100
      %1107 = vst [vmem:[#allocation3 + $0xb0] sm:$0xff] %v1101
      %1108 = vst [vmem:[#allocation3 + $0xb8] sm:$0xff] %v1102
      %s1109 = scalar_lea.vmem %s3, 38
      %v1110 = vld [vmem:[%s1109] ss:$8 sm:$0x3]
      %1111 = vrot.lane.b32.xlu0 %v949, 65
      %v1112 = vpop.permute.xlu0 %1111
      %1113 = vrot.lane.b32.xlu0 %v951, 65
      %v1114 = vpop.permute.xlu0 %1113
      %1115 = vrot.lane.b32.xlu0 %v953, 65
      %v1116 = vpop.permute.xlu0 %1115
      %1117 = vrot.lane.b32.xlu0 %v950, 65
      %v1118 = vpop.permute.xlu0 %1117
      %1119 = vrot.lane.b32.xlu0 %v952, 65
      %v1120 = vpop.permute.xlu0 %1119
      %1121 = vrot.lane.b32.xlu0 %v954, 65
      %v1122 = vpop.permute.xlu0 %1121
      %v1123 = vsel %vm574, %v1112, %v1118
      %v1124 = vsel %vm574, %v1114, %v1120
      %v1125 = vsel %vm574, %v1116, %v1122
      %v1126 = vsel %vm574, %v1118, %v1112
      %v1127 = vsel %vm574, %v1120, %v1114
      %v1128 = vsel %vm574, %v1122, %v1116
      %v1130 = vlaneseq
      %v1131 = vshrl.u32 %v1130, 7
      %v1132 = vsub.s32 0, %v1131
      %v1133 = vrot.slane %v1110, %v1132
      %v1134 = vlaneseq
      %v1135 = vshrl.u32 %v1134, 7
      %v1136 = vsub.s32 1, %v1135
      %v1137 = vrot.slane %v1110, %v1136
      %v1140 = vmul.f32 %v1126, %v1133
      %v1141 = vmul.f32 %v1123, %v1137
      %v1142 = vmul.f32 %v1127, %v1133
      %v1143 = vmul.f32 %v1124, %v1137
      %v1144 = vmul.f32 %v1128, %v1133
      %v1145 = vmul.f32 %v1125, %v1137
      %1146 = vst [vmem:[#allocation3 + $0xc0] sm:$0xff] %v1140
      %1147 = vst [vmem:[#allocation3 + $0xc8] sm:$0xff] %v1141
      %1148 = vst [vmem:[#allocation3 + $0xd0] sm:$0xff] %v1142
      %1149 = vst [vmem:[#allocation3 + $0xd8] sm:$0xff] %v1143
      %1150 = vst [vmem:[#allocation3 + $0xe0] sm:$0xff] %v1144
      %1151 = vst [vmem:[#allocation3 + $0xe8] sm:$0xff] %v1145
      %s1152 = scalar_lea.vmem %s3, 39
      %v1153 = vld [vmem:[%s1152] ss:$8 sm:$0x3]
      %1154 = vrot.lane.b32.xlu0 %v949, 64
      %v1155 = vpop.permute.xlu0 %1154
      %1156 = vrot.lane.b32.xlu0 %v951, 64
      %v1157 = vpop.permute.xlu0 %1156
      %1158 = vrot.lane.b32.xlu0 %v953, 64
      %v1159 = vpop.permute.xlu0 %1158
      %1160 = vrot.lane.b32.xlu0 %v950, 64
      %v1161 = vpop.permute.xlu0 %1160
      %1162 = vrot.lane.b32.xlu0 %v952, 64
      %v1163 = vpop.permute.xlu0 %1162
      %1164 = vrot.lane.b32.xlu0 %v954, 64
      %v1165 = vpop.permute.xlu0 %1164
      %v1166 = vsel %vm608, %v1155, %v1161
      %v1167 = vsel %vm608, %v1157, %v1163
      %v1168 = vsel %vm608, %v1159, %v1165
      %v1169 = vsel %vm608, %v1161, %v1155
      %v1170 = vsel %vm608, %v1163, %v1157
      %v1171 = vsel %vm608, %v1165, %v1159
      %v1173 = vlaneseq
      %v1174 = vshrl.u32 %v1173, 7
      %v1175 = vsub.s32 0, %v1174
      %v1176 = vrot.slane %v1153, %v1175
      %v1177 = vlaneseq
      %v1178 = vshrl.u32 %v1177, 7
      %v1179 = vsub.s32 1, %v1178
      %v1180 = vrot.slane %v1153, %v1179
      %v1183 = vmul.f32 %v1169, %v1176
      %v1184 = vmul.f32 %v1166, %v1180
      %v1185 = vmul.f32 %v1170, %v1176
      %v1186 = vmul.f32 %v1167, %v1180
      %v1187 = vmul.f32 %v1171, %v1176
      %v1188 = vmul.f32 %v1168, %v1180
      %1189 = vst [vmem:[#allocation3 + $0xf0] sm:$0xff] %v1183
      %1190 = vst [vmem:[#allocation3 + $0xf8] sm:$0xff] %v1184
      %1191 = vst [vmem:[#allocation3 + $0x100] sm:$0xff] %v1185
      %1192 = vst [vmem:[#allocation3 + $0x108] sm:$0xff] %v1186
      %1193 = vst [vmem:[#allocation3 + $0x110] sm:$0xff] %v1187
      %1194 = vst [vmem:[#allocation3 + $0x118] sm:$0xff] %v1188
      %s1195 = scalar_lea.vmem %s3, 48
      %v1196 = vld [vmem:[%s1195] ss:$8 sm:$0x3]
      %v1198 = vlaneseq
      %v1199 = vshrl.u32 %v1198, 7
      %v1200 = vsub.s32 0, %v1199
      %v1201 = vrot.slane %v1196, %v1200
      %v1202 = vlaneseq
      %v1203 = vshrl.u32 %v1202, 7
      %v1204 = vsub.s32 1, %v1203
      %v1205 = vrot.slane %v1196, %v1204
      %v1208 = vmul.f32 %v972, %v1201
      %v1209 = vmul.f32 %v969, %v1205
      %v1210 = vmul.f32 %v973, %v1201
      %v1211 = vmul.f32 %v970, %v1205
      %v1212 = vmul.f32 %v974, %v1201
      %v1213 = vmul.f32 %v971, %v1205
      %1214 = vst [vmem:[#allocation3 + $0x120] sm:$0xff] %v1208
      %1215 = vst [vmem:[#allocation3 + $0x128] sm:$0xff] %v1209
      %1216 = vst [vmem:[#allocation3 + $0x130] sm:$0xff] %v1210
      %1217 = vst [vmem:[#allocation3 + $0x138] sm:$0xff] %v1211
      %1218 = vst [vmem:[#allocation3 + $0x140] sm:$0xff] %v1212
      %1219 = vst [vmem:[#allocation3 + $0x148] sm:$0xff] %v1213
      %s1220 = scalar_lea.vmem %s3, 49
      %v1221 = vld [vmem:[%s1220] ss:$8 sm:$0x3]
      %v1223 = vlaneseq
      %v1224 = vshrl.u32 %v1223, 7
      %v1225 = vsub.s32 0, %v1224
      %v1226 = vrot.slane %v1221, %v1225
      %v1227 = vlaneseq
      %v1228 = vshrl.u32 %v1227, 7
      %v1229 = vsub.s32 1, %v1228
      %v1230 = vrot.slane %v1221, %v1229
      %v1233 = vmul.f32 %v1015, %v1226
      %v1234 = vmul.f32 %v1012, %v1230
      %v1235 = vmul.f32 %v1016, %v1226
      %v1236 = vmul.f32 %v1013, %v1230
      %v1237 = vmul.f32 %v1017, %v1226
      %v1238 = vmul.f32 %v1014, %v1230
      %1239 = vst [vmem:[#allocation3 + $0x150] sm:$0xff] %v1233
      %1240 = vst [vmem:[#allocation3 + $0x158] sm:$0xff] %v1234
      %1241 = vst [vmem:[#allocation3 + $0x160] sm:$0xff] %v1235
      %1242 = vst [vmem:[#allocation3 + $0x168] sm:$0xff] %v1236
      %1243 = vst [vmem:[#allocation3 + $0x170] sm:$0xff] %v1237
      %1244 = vst [vmem:[#allocation3 + $0x178] sm:$0xff] %v1238
      %1245 = vst [vmem:[#allocation3 + $0x180] sm:$0xff] %v949
      %1246 = vst [vmem:[#allocation3 + $0x188] sm:$0xff] %v950
      %1247 = vst [vmem:[#allocation3 + $0x190] sm:$0xff] %v951
      %1248 = vst [vmem:[#allocation3 + $0x198] sm:$0xff] %v952
      %1249 = vst [vmem:[#allocation3 + $0x1a0] sm:$0xff] %v953
      %1250 = vst [vmem:[#allocation3 + $0x1a8] sm:$0xff] %v954
      %s1251 = scalar_lea.vmem %s1, 32
      %v1252 = vld [vmem:[%s1251] sm:$0xff]
      %v1253 = vld [vmem:[%s1251 + $0x8] sm:$0xff]
      %v1254 = vld [vmem:[#allocation3] sm:$0xff]
      %v1255 = vld [vmem:[#allocation3 + $0x8] sm:$0xff]
      %v1256 = vld [vmem:[#allocation3 + $0x10] sm:$0xff]
      %v1257 = vld [vmem:[#allocation3 + $0x18] sm:$0xff]
      %v1258 = vld [vmem:[#allocation3 + $0x20] sm:$0xff]
      %v1259 = vld [vmem:[#allocation3 + $0x28] sm:$0xff]
      %v1260 = vld [vmem:[#allocation3 + $0x30] sm:$0xff]
      %v1261 = vld [vmem:[#allocation3 + $0x38] sm:$0xff]
      %v1262 = vld [vmem:[#allocation3 + $0x40] sm:$0xff]
      %v1263 = vld [vmem:[#allocation3 + $0x48] sm:$0xff]
      %v1264 = vld [vmem:[#allocation3 + $0x50] sm:$0xff]
      %v1265 = vld [vmem:[#allocation3 + $0x58] sm:$0xff]
      %v1266 = vld [vmem:[#allocation3 + $0x60] sm:$0xff]
      %v1267 = vld [vmem:[#allocation3 + $0x68] sm:$0xff]
      %v1268 = vld [vmem:[#allocation3 + $0x70] sm:$0xff]
      %v1269 = vld [vmem:[#allocation3 + $0x78] sm:$0xff]
      %v1270 = vld [vmem:[#allocation3 + $0x80] sm:$0xff]
      %v1271 = vld [vmem:[#allocation3 + $0x88] sm:$0xff]
      %v1272 = vld [vmem:[#allocation3 + $0x90] sm:$0xff]
      %v1273 = vld [vmem:[#allocation3 + $0x98] sm:$0xff]
      %v1274 = vld [vmem:[#allocation3 + $0xa0] sm:$0xff]
      %v1275 = vld [vmem:[#allocation3 + $0xa8] sm:$0xff]
      %v1276 = vld [vmem:[#allocation3 + $0xb0] sm:$0xff]
      %v1277 = vld [vmem:[#allocation3 + $0xb8] sm:$0xff]
      %v1278 = vld [vmem:[#allocation3 + $0xc0] sm:$0xff]
      %v1279 = vld [vmem:[#allocation3 + $0xc8] sm:$0xff]
      %v1280 = vld [vmem:[#allocation3 + $0xd0] sm:$0xff]
      %v1281 = vld [vmem:[#allocation3 + $0xd8] sm:$0xff]
      %v1282 = vld [vmem:[#allocation3 + $0xe0] sm:$0xff]
      %v1283 = vld [vmem:[#allocation3 + $0xe8] sm:$0xff]
      %v1284 = vld [vmem:[#allocation3 + $0xf0] sm:$0xff]
      %v1285 = vld [vmem:[#allocation3 + $0xf8] sm:$0xff]
      %v1286 = vld [vmem:[#allocation3 + $0x100] sm:$0xff]
      %v1287 = vld [vmem:[#allocation3 + $0x108] sm:$0xff]
      %v1288 = vld [vmem:[#allocation3 + $0x110] sm:$0xff]
      %v1289 = vld [vmem:[#allocation3 + $0x118] sm:$0xff]
      %v1290 = vld [vmem:[#allocation3 + $0x120] sm:$0xff]
      %v1291 = vld [vmem:[#allocation3 + $0x128] sm:$0xff]
      %v1292 = vld [vmem:[#allocation3 + $0x130] sm:$0xff]
      %v1293 = vld [vmem:[#allocation3 + $0x138] sm:$0xff]
      %v1294 = vld [vmem:[#allocation3 + $0x140] sm:$0xff]
      %v1295 = vld [vmem:[#allocation3 + $0x148] sm:$0xff]
      %v1296 = vld [vmem:[#allocation3 + $0x150] sm:$0xff]
      %v1297 = vld [vmem:[#allocation3 + $0x158] sm:$0xff]
      %v1298 = vld [vmem:[#allocation3 + $0x160] sm:$0xff]
      %v1299 = vld [vmem:[#allocation3 + $0x168] sm:$0xff]
      %v1300 = vld [vmem:[#allocation3 + $0x170] sm:$0xff]
      %v1301 = vld [vmem:[#allocation3 + $0x178] sm:$0xff]
      %v1302 = vld [vmem:[#allocation3 + $0x180] sm:$0xff]
      %v1303 = vld [vmem:[#allocation3 + $0x188] sm:$0xff]
      %v1304 = vld [vmem:[#allocation3 + $0x190] sm:$0xff]
      %v1305 = vld [vmem:[#allocation3 + $0x198] sm:$0xff]
      %v1306 = vld [vmem:[#allocation3 + $0x1a0] sm:$0xff]
      %v1307 = vld [vmem:[#allocation3 + $0x1a8] sm:$0xff]
      %vm1308 = vcmask 719872
      %v1310 = vsel %vm1308, %v1253, 0
      %1312 = vmatprep.subr.mxu0 %v1285
      %1313 = vmatpush1.msra.mxu0 %v1284
      %1314 = vmatprep.subr.mxu0 %v1283
      %1315 = vmatpush1.msra.mxu0 %v1282
      %1316 = vmatprep.subr.mxu0 %v1281
      %1317 = vmatpush1.msra.mxu0 %v1280
      %1318 = vmatprep.subr.mxu0 %v1279
      %1319 = vmatpush1.msra.mxu0 %v1278
      %1320 = vmatprep.subr.mxu0 %v1277
      %1321 = vmatpush1.msra.mxu0 %v1276
      %1322 = vmatprep.subr.mxu0 %v1275
      %1323 = vmatpush1.msra.mxu0 %v1274
      %1324 = vmatprep.subr.mxu0 %v1273
      %1325 = vmatpush1.msra.mxu0 %v1272
      %1326 = vmatprep.subr.mxu0 %v1271
      %1327 = vmatpush1.msra.mxu0 %v1270
      %1328 = vmatprep.subr.mxu0 %v1269
      %1329 = vmatpush1.msra.mxu0 %v1268
      %1330 = vmatprep.subr.mxu0 %v1267
      %1331 = vmatpush1.msra.mxu0 %v1266
      %1332 = vmatprep.subr.mxu0 %v1265
      %1333 = vmatpush1.msra.mxu0 %v1264
      %1334 = vmatprep.subr.mxu0 %v1263
      %1335 = vmatpush1.msra.mxu0 %v1262
      %1336 = vmatprep.subr.mxu0 %v1261
      %1337 = vmatpush1.msra.mxu0 %v1260
      %1338 = vmatprep.subr.mxu0 %v1259
      %1339 = vmatpush1.msra.mxu0 %v1258
      %1340 = vmatprep.subr.mxu0 %v1257
      %1341 = vmatpush1.msra.mxu0 %v1256
      %1342 = vmatprep.subr.mxu0 %v1255
      %1343 = vmatpush1.msra.mxu0 %v1254
      %1344 = vmatprep.subr.mxu0 0.0
      %1345 = vmatpush2.msra.mxu0 0.0
      %1346 = vmatprep.subr.mxu0 0.0
      %1347 = vmatpush2.msra.mxu0 0.0
      %1348 = vmatprep.subr.mxu0 0.0
      %1349 = vmatpush2.msra.mxu0 0.0
      %1350 = vmatprep.subr.mxu0 0.0
      %1351 = vmatpush2.msra.mxu0 0.0
      %1352 = vmatprep.subr.mxu0 0.0
      %1353 = vmatpush2.msra.mxu0 0.0
      %1354 = vmatprep.subr.mxu0 %v1307
      %1355 = vmatpush2.msra.mxu0 %v1306
      %1356 = vmatprep.subr.mxu0 %v1305
      %1357 = vmatpush2.msra.mxu0 %v1304
      %1358 = vmatprep.subr.mxu0 %v1303
      %1359 = vmatpush2.msra.mxu0 %v1302
      %1360 = vmatprep.subr.mxu0 %v1301
      %1361 = vmatpush2.msra.mxu0 %v1300
      %1362 = vmatprep.subr.mxu0 %v1299
      %1363 = vmatpush2.msra.mxu0 %v1298
      %1364 = vmatprep.subr.mxu0 %v1297
      %1365 = vmatpush2.msra.mxu0 %v1296
      %1366 = vmatprep.subr.mxu0 %v1295
      %1367 = vmatpush2.msra.mxu0 %v1294
      %1368 = vmatprep.subr.mxu0 %v1293
      %1369 = vmatpush2.msra.mxu0 %v1292
      %1370 = vmatprep.subr.mxu0 %v1291
      %1371 = vmatpush2.msra.mxu0 %v1290
      %1372 = vmatprep.subr.mxu0 %v1289
      %1373 = vmatpush2.msra.mxu0 %v1288
      %1374 = vmatprep.subr.mxu0 %v1287
      %1375 = vmatpush2.msra.mxu0 %v1286
      %1376 = vmatprep.mubr.f32.mxu0 %v1310
      %1377 = vmatmul.mubr.f32.gmra.mxu0 %v1252
      %v1378 = vpop.f32.mrf.mxu0
      %v1379 = vadd.f32 0.0, %v1378
      %v1380 = vpop.f32.mrf.mxu0
      %v1381 = vadd.f32 0.0, %v1380
      %1382 = vdwg.mxu0
      %v1383 = vadd.f32 %v1379, %v1381
      %1384 = vadd.xlane.f32.xlu0 %v1383
      %v1385 = vpop.xlane.xlu0 %1384
      %v1386 = vmul.f32 %v1379, %v1379
      %v1387 = vmul.f32 %v1381, %v1381
      %v1388 = vadd.f32 %v1386, %v1387
      %1389 = vadd.xlane.f32.xlu0 %v1388
      %v1390 = vpop.xlane.xlu0 %1389
      %v1391 = vmul.f32 %v1385, 0.00390625
      %v1392 = vmul.f32 %v1390, 0.00390625
      %v1393 = vmul.f32 %v1391, %v1391
      %v1394 = vsub.f32 %v1392, %v1393
      %v1395 = vmax.f32 %v1394, 0.0
      %v1396 = vsub.f32 %v1379, %v1391
      %v1397 = vsub.f32 %v1381, %v1391
      %v1398 = vadd.f32 %v1395, 1e-05
      %v1399 = vrsqrt.pop %v1398
      %v1400 = vmul.f32 %v1396, %v1399
      %v1401 = vmul.f32 %v1397, %v1399
      %vm1402 = vcmp.gt.f32.partialorder %v1400, 0.0
      %vm1403 = vcmp.gt.f32.partialorder %v1401, 0.0
      %s1404 = scalar_lea.vmem %s2, 16
      %v1405 = vld [vmem:[%s1404] sm:$0xff]
      %1407 = vset.pattern.permute.xlu0 0
      %1408 = vperm.xlu0 %1407, %v1405
      %v1409 = vpop.permute.xlu0 %1408
      %v1411 = vmul.f32 %v1409, %v1400
      %v1412 = vmul.f32 %v1409, %v1401
      %v1413 = vsel %vm1402, %v1400, %v1411
      %v1414 = vsel %vm1403, %v1401, %v1412
      %1415 = vst [vmem:[#allocation2] sm:$0xff] %v1413
      %1416 = vst [vmem:[#allocation2 + $0x8] sm:$0xff] %v1414
      %v1417 = vld [vmem:[#allocation2] sm:$0xff]
      %v1418 = vld [vmem:[#allocation2 + $0x8] sm:$0xff]
      %v1419 = vld [vmem:[#allocation2 + $0x10] sm:$0xff]
      %v1420 = vld [vmem:[#allocation2 + $0x18] sm:$0xff]
      %v1421 = vld [vmem:[#allocation2 + $0x20] sm:$0xff]
      %v1422 = vld [vmem:[#allocation2 + $0x28] sm:$0xff]
      %v1423 = vld [vmem:[#allocation2 + $0x30] sm:$0xff]
      %v1424 = vld [vmem:[#allocation2 + $0x38] sm:$0xff]
      %s1425 = scalar_lea.vmem %s3, 54
      %v1426 = vld [vmem:[%s1425] ss:$8 sm:$0x3]
      %1427 = vrot.lane.b32.xlu0 %v1417, 2
      %v1428 = vpop.permute.xlu0 %1427
      %1429 = vrot.lane.b32.xlu0 %v1419, 2
      %v1430 = vpop.permute.xlu0 %1429
      %1431 = vrot.lane.b32.xlu0 %v1421, 2
      %v1432 = vpop.permute.xlu0 %1431
      %1433 = vrot.lane.b32.xlu0 %v1423, 2
      %v1434 = vpop.permute.xlu0 %1433
      %1435 = vrot.lane.b32.xlu0 %v1418, 2
      %v1436 = vpop.permute.xlu0 %1435
      %1437 = vrot.lane.b32.xlu0 %v1420, 2
      %v1438 = vpop.permute.xlu0 %1437
      %1439 = vrot.lane.b32.xlu0 %v1422, 2
      %v1440 = vpop.permute.xlu0 %1439
      %1441 = vrot.lane.b32.xlu0 %v1424, 2
      %v1442 = vpop.permute.xlu0 %1441
      %v1443 = vsel %vm355, %v1428, %v1436
      %v1444 = vsel %vm355, %v1430, %v1438
      %v1445 = vsel %vm355, %v1432, %v1440
      %v1446 = vsel %vm355, %v1434, %v1442
      %v1447 = vsel %vm355, %v1436, %v1428
      %v1448 = vsel %vm355, %v1438, %v1430
      %v1449 = vsel %vm355, %v1440, %v1432
      %v1450 = vsel %vm355, %v1442, %v1434
      %v1452 = vlaneseq
      %v1453 = vshrl.u32 %v1452, 7
      %v1454 = vsub.s32 0, %v1453
      %v1455 = vrot.slane %v1426, %v1454
      %v1456 = vlaneseq
      %v1457 = vshrl.u32 %v1456, 7
      %v1458 = vsub.s32 1, %v1457
      %v1459 = vrot.slane %v1426, %v1458
      %v1462 = vmul.f32 %v1443, %v1455
      %v1463 = vmul.f32 %v1447, %v1459
      %v1464 = vmul.f32 %v1444, %v1455
      %v1465 = vmul.f32 %v1448, %v1459
      %v1466 = vmul.f32 %v1445, %v1455
      %v1467 = vmul.f32 %v1449, %v1459
      %v1468 = vmul.f32 %v1446, %v1455
      %v1469 = vmul.f32 %v1450, %v1459
      %1470 = vst [vmem:[#allocation3] sm:$0xff] %v1462
      %1471 = vst [vmem:[#allocation3 + $0x8] sm:$0xff] %v1463
      %1472 = vst [vmem:[#allocation3 + $0x10] sm:$0xff] %v1464
      %1473 = vst [vmem:[#allocation3 + $0x18] sm:$0xff] %v1465
      %1474 = vst [vmem:[#allocation3 + $0x20] sm:$0xff] %v1466
      %1475 = vst [vmem:[#allocation3 + $0x28] sm:$0xff] %v1467
      %1476 = vst [vmem:[#allocation3 + $0x30] sm:$0xff] %v1468
      %1477 = vst [vmem:[#allocation3 + $0x38] sm:$0xff] %v1469
      %s1478 = scalar_lea.vmem %s3, 55
      %v1479 = vld [vmem:[%s1478] ss:$8 sm:$0x3]
      %1480 = vrot.lane.b32.xlu0 %v1417, 1
      %v1481 = vpop.permute.xlu0 %1480
      %1482 = vrot.lane.b32.xlu0 %v1419, 1
      %v1483 = vpop.permute.xlu0 %1482
      %1484 = vrot.lane.b32.xlu0 %v1421, 1
      %v1485 = vpop.permute.xlu0 %1484
      %1486 = vrot.lane.b32.xlu0 %v1423, 1
      %v1487 = vpop.permute.xlu0 %1486
      %1488 = vrot.lane.b32.xlu0 %v1418, 1
      %v1489 = vpop.permute.xlu0 %1488
      %1490 = vrot.lane.b32.xlu0 %v1420, 1
      %v1491 = vpop.permute.xlu0 %1490
      %1492 = vrot.lane.b32.xlu0 %v1422, 1
      %v1493 = vpop.permute.xlu0 %1492
      %1494 = vrot.lane.b32.xlu0 %v1424, 1
      %v1495 = vpop.permute.xlu0 %1494
      %v1496 = vsel %vm379, %v1481, %v1489
      %v1497 = vsel %vm379, %v1483, %v1491
      %v1498 = vsel %vm379, %v1485, %v1493
      %v1499 = vsel %vm379, %v1487, %v1495
      %v1500 = vsel %vm379, %v1489, %v1481
      %v1501 = vsel %vm379, %v1491, %v1483
      %v1502 = vsel %vm379, %v1493, %v1485
      %v1503 = vsel %vm379, %v1495, %v1487
      %v1505 = vlaneseq
      %v1506 = vshrl.u32 %v1505, 7
      %v1507 = vsub.s32 0, %v1506
      %v1508 = vrot.slane %v1479, %v1507
      %v1509 = vlaneseq
      %v1510 = vshrl.u32 %v1509, 7
      %v1511 = vsub.s32 1, %v1510
      %v1512 = vrot.slane %v1479, %v1511
      %v1515 = vmul.f32 %v1496, %v1508
      %v1516 = vmul.f32 %v1500, %v1512
      %v1517 = vmul.f32 %v1497, %v1508
      %v1518 = vmul.f32 %v1501, %v1512
      %v1519 = vmul.f32 %v1498, %v1508
      %v1520 = vmul.f32 %v1502, %v1512
      %v1521 = vmul.f32 %v1499, %v1508
      %v1522 = vmul.f32 %v1503, %v1512
      %1523 = vst [vmem:[#allocation3 + $0x40] sm:$0xff] %v1515
      %1524 = vst [vmem:[#allocation3 + $0x48] sm:$0xff] %v1516
      %1525 = vst [vmem:[#allocation3 + $0x50] sm:$0xff] %v1517
      %1526 = vst [vmem:[#allocation3 + $0x58] sm:$0xff] %v1518
      %1527 = vst [vmem:[#allocation3 + $0x60] sm:$0xff] %v1519
      %1528 = vst [vmem:[#allocation3 + $0x68] sm:$0xff] %v1520
      %1529 = vst [vmem:[#allocation3 + $0x70] sm:$0xff] %v1521
      %1530 = vst [vmem:[#allocation3 + $0x78] sm:$0xff] %v1522
      %s1531 = scalar_lea.vmem %s3, 64
      %v1532 = vld [vmem:[%s1531] ss:$8 sm:$0x3]
      %v1534 = vlaneseq
      %v1535 = vshrl.u32 %v1534, 7
      %v1536 = vsub.s32 0, %v1535
      %v1537 = vrot.slane %v1532, %v1536
      %v1538 = vlaneseq
      %v1539 = vshrl.u32 %v1538, 7
      %v1540 = vsub.s32 1, %v1539
      %v1541 = vrot.slane %v1532, %v1540
      %v1544 = vmul.f32 %v1418, %v1537
      %v1545 = vmul.f32 %v1417, %v1541
      %v1546 = vmul.f32 %v1420, %v1537
      %v1547 = vmul.f32 %v1419, %v1541
      %v1548 = vmul.f32 %v1422, %v1537
      %v1549 = vmul.f32 %v1421, %v1541
      %v1550 = vmul.f32 %v1424, %v1537
      %v1551 = vmul.f32 %v1423, %v1541
      %1552 = vst [vmem:[#allocation3 + $0x80] sm:$0xff] %v1544
      %1553 = vst [vmem:[#allocation3 + $0x88] sm:$0xff] %v1545
      %1554 = vst [vmem:[#allocation3 + $0x90] sm:$0xff] %v1546
      %1555 = vst [vmem:[#allocation3 + $0x98] sm:$0xff] %v1547
      %1556 = vst [vmem:[#allocation3 + $0xa0] sm:$0xff] %v1548
      %1557 = vst [vmem:[#allocation3 + $0xa8] sm:$0xff] %v1549
      %1558 = vst [vmem:[#allocation3 + $0xb0] sm:$0xff] %v1550
      %1559 = vst [vmem:[#allocation3 + $0xb8] sm:$0xff] %v1551
      %s1560 = scalar_lea.vmem %s3, 65
      %v1561 = vld [vmem:[%s1560] ss:$8 sm:$0x3]
      %v1563 = vlaneseq
      %v1564 = vshrl.u32 %v1563, 7
      %v1565 = vsub.s32 0, %v1564
      %v1566 = vrot.slane %v1561, %v1565
      %v1567 = vlaneseq
      %v1568 = vshrl.u32 %v1567, 7
      %v1569 = vsub.s32 1, %v1568
      %v1570 = vrot.slane %v1561, %v1569
      %v1573 = vmul.f32 %v1447, %v1566
      %v1574 = vmul.f32 %v1443, %v1570
      %v1575 = vmul.f32 %v1448, %v1566
      %v1576 = vmul.f32 %v1444, %v1570
      %v1577 = vmul.f32 %v1449, %v1566
      %v1578 = vmul.f32 %v1445, %v1570
      %v1579 = vmul.f32 %v1450, %v1566
      %v1580 = vmul.f32 %v1446, %v1570
      %1581 = vst [vmem:[#allocation3 + $0xc0] sm:$0xff] %v1573
      %1582 = vst [vmem:[#allocation3 + $0xc8] sm:$0xff] %v1574
      %1583 = vst [vmem:[#allocation3 + $0xd0] sm:$0xff] %v1575
      %1584 = vst [vmem:[#allocation3 + $0xd8] sm:$0xff] %v1576
      %1585 = vst [vmem:[#allocation3 + $0xe0] sm:$0xff] %v1577
      %1586 = vst [vmem:[#allocation3 + $0xe8] sm:$0xff] %v1578
      %1587 = vst [vmem:[#allocation3 + $0xf0] sm:$0xff] %v1579
      %1588 = vst [vmem:[#allocation3 + $0xf8] sm:$0xff] %v1580
      %s1589 = scalar_lea.vmem %s3, 66
      %v1590 = vld [vmem:[%s1589] ss:$8 sm:$0x3]
      %v1592 = vlaneseq
      %v1593 = vshrl.u32 %v1592, 7
      %v1594 = vsub.s32 0, %v1593
      %v1595 = vrot.slane %v1590, %v1594
      %v1596 = vlaneseq
      %v1597 = vshrl.u32 %v1596, 7
      %v1598 = vsub.s32 1, %v1597
      %v1599 = vrot.slane %v1590, %v1598
      %v1602 = vmul.f32 %v1500, %v1595
      %v1603 = vmul.f32 %v1496, %v1599
      %v1604 = vmul.f32 %v1501, %v1595
      %v1605 = vmul.f32 %v1497, %v1599
      %v1606 = vmul.f32 %v1502, %v1595
      %v1607 = vmul.f32 %v1498, %v1599
      %v1608 = vmul.f32 %v1503, %v1595
      %v1609 = vmul.f32 %v1499, %v1599
      %1610 = vst [vmem:[#allocation3 + $0x100] sm:$0xff] %v1602
      %1611 = vst [vmem:[#allocation3 + $0x108] sm:$0xff] %v1603
      %1612 = vst [vmem:[#allocation3 + $0x110] sm:$0xff] %v1604
      %1613 = vst [vmem:[#allocation3 + $0x118] sm:$0xff] %v1605
      %1614 = vst [vmem:[#allocation3 + $0x120] sm:$0xff] %v1606
      %1615 = vst [vmem:[#allocation3 + $0x128] sm:$0xff] %v1607
      %1616 = vst [vmem:[#allocation3 + $0x130] sm:$0xff] %v1608
      %1617 = vst [vmem:[#allocation3 + $0x138] sm:$0xff] %v1609
      %1618 = vst [vmem:[#allocation3 + $0x140] sm:$0xff] %v1417
      %1619 = vst [vmem:[#allocation3 + $0x148] sm:$0xff] %v1418
      %1620 = vst [vmem:[#allocation3 + $0x150] sm:$0xff] %v1419
      %1621 = vst [vmem:[#allocation3 + $0x158] sm:$0xff] %v1420
      %1622 = vst [vmem:[#allocation3 + $0x160] sm:$0xff] %v1421
      %1623 = vst [vmem:[#allocation3 + $0x168] sm:$0xff] %v1422
      %1624 = vst [vmem:[#allocation3 + $0x170] sm:$0xff] %v1423
      %1625 = vst [vmem:[#allocation3 + $0x178] sm:$0xff] %v1424
      %s1626 = scalar_lea.vmem %s1, 48
      %v1627 = vld [vmem:[%s1626] sm:$0xff]
      %v1628 = vld [vmem:[%s1626 + $0x8] sm:$0xff]
      %v1629 = vld [vmem:[#allocation3] sm:$0xff]
      %v1630 = vld [vmem:[#allocation3 + $0x8] sm:$0xff]
      %v1631 = vld [vmem:[#allocation3 + $0x10] sm:$0xff]
      %v1632 = vld [vmem:[#allocation3 + $0x18] sm:$0xff]
      %v1633 = vld [vmem:[#allocation3 + $0x20] sm:$0xff]
      %v1634 = vld [vmem:[#allocation3 + $0x28] sm:$0xff]
      %v1635 = vld [vmem:[#allocation3 + $0x30] sm:$0xff]
      %v1636 = vld [vmem:[#allocation3 + $0x38] sm:$0xff]
      %v1637 = vld [vmem:[#allocation3 + $0x40] sm:$0xff]
      %v1638 = vld [vmem:[#allocation3 + $0x48] sm:$0xff]
      %v1639 = vld [vmem:[#allocation3 + $0x50] sm:$0xff]
      %v1640 = vld [vmem:[#allocation3 + $0x58] sm:$0xff]
      %v1641 = vld [vmem:[#allocation3 + $0x60] sm:$0xff]
      %v1642 = vld [vmem:[#allocation3 + $0x68] sm:$0xff]
      %v1643 = vld [vmem:[#allocation3 + $0x70] sm:$0xff]
      %v1644 = vld [vmem:[#allocation3 + $0x78] sm:$0xff]
      %v1645 = vld [vmem:[#allocation3 + $0x80] sm:$0xff]
      %v1646 = vld [vmem:[#allocation3 + $0x88] sm:$0xff]
      %v1647 = vld [vmem:[#allocation3 + $0x90] sm:$0xff]
      %v1648 = vld [vmem:[#allocation3 + $0x98] sm:$0xff]
      %v1649 = vld [vmem:[#allocation3 + $0xa0] sm:$0xff]
      %v1650 = vld [vmem:[#allocation3 + $0xa8] sm:$0xff]
      %v1651 = vld [vmem:[#allocation3 + $0xb0] sm:$0xff]
      %v1652 = vld [vmem:[#allocation3 + $0xb8] sm:$0xff]
      %v1653 = vld [vmem:[#allocation3 + $0xc0] sm:$0xff]
      %v1654 = vld [vmem:[#allocation3 + $0xc8] sm:$0xff]
      %v1655 = vld [vmem:[#allocation3 + $0xd0] sm:$0xff]
      %v1656 = vld [vmem:[#allocation3 + $0xd8] sm:$0xff]
      %v1657 = vld [vmem:[#allocation3 + $0xe0] sm:$0xff]
      %v1658 = vld [vmem:[#allocation3 + $0xe8] sm:$0xff]
      %v1659 = vld [vmem:[#allocation3 + $0xf0] sm:$0xff]
      %v1660 = vld [vmem:[#allocation3 + $0xf8] sm:$0xff]
      %v1661 = vld [vmem:[#allocation3 + $0x100] sm:$0xff]
      %v1662 = vld [vmem:[#allocation3 + $0x108] sm:$0xff]
      %v1663 = vld [vmem:[#allocation3 + $0x110] sm:$0xff]
      %v1664 = vld [vmem:[#allocation3 + $0x118] sm:$0xff]
      %v1665 = vld [vmem:[#allocation3 + $0x120] sm:$0xff]
      %v1666 = vld [vmem:[#allocation3 + $0x128] sm:$0xff]
      %v1667 = vld [vmem:[#allocation3 + $0x130] sm:$0xff]
      %v1668 = vld [vmem:[#allocation3 + $0x138] sm:$0xff]
      %v1669 = vld [vmem:[#allocation3 + $0x140] sm:$0xff]
      %v1670 = vld [vmem:[#allocation3 + $0x148] sm:$0xff]
      %v1671 = vld [vmem:[#allocation3 + $0x150] sm:$0xff]
      %v1672 = vld [vmem:[#allocation3 + $0x158] sm:$0xff]
      %v1673 = vld [vmem:[#allocation3 + $0x160] sm:$0xff]
      %v1674 = vld [vmem:[#allocation3 + $0x168] sm:$0xff]
      %v1675 = vld [vmem:[#allocation3 + $0x170] sm:$0xff]
      %v1676 = vld [vmem:[#allocation3 + $0x178] sm:$0xff]
      %vm1677 = vcmask 523264
      %v1679 = vsel %vm1677, %v1628, 0
      %1681 = vmatprep.subr.mxu0 %v1660
      %1682 = vmatpush1.msra.mxu0 %v1659
      %1683 = vmatprep.subr.mxu0 %v1658
      %1684 = vmatpush1.msra.mxu0 %v1657
      %1685 = vmatprep.subr.mxu0 %v1656
      %1686 = vmatpush1.msra.mxu0 %v1655
      %1687 = vmatprep.subr.mxu0 %v1654
      %1688 = vmatpush1.msra.mxu0 %v1653
      %1689 = vmatprep.subr.mxu0 %v1652
      %1690 = vmatpush1.msra.mxu0 %v1651
      %1691 = vmatprep.subr.mxu0 %v1650
      %1692 = vmatpush1.msra.mxu0 %v1649
      %1693 = vmatprep.subr.mxu0 %v1648
      %1694 = vmatpush1.msra.mxu0 %v1647
      %1695 = vmatprep.subr.mxu0 %v1646
      %1696 = vmatpush1.msra.mxu0 %v1645
      %1697 = vmatprep.subr.mxu0 %v1644
      %1698 = vmatpush1.msra.mxu0 %v1643
      %1699 = vmatprep.subr.mxu0 %v1642
      %1700 = vmatpush1.msra.mxu0 %v1641
      %1701 = vmatprep.subr.mxu0 %v1640
      %1702 = vmatpush1.msra.mxu0 %v1639
      %1703 = vmatprep.subr.mxu0 %v1638
      %1704 = vmatpush1.msra.mxu0 %v1637
      %1705 = vmatprep.subr.mxu0 %v1636
      %1706 = vmatpush1.msra.mxu0 %v1635
      %1707 = vmatprep.subr.mxu0 %v1634
      %1708 = vmatpush1.msra.mxu0 %v1633
      %1709 = vmatprep.subr.mxu0 %v1632
      %1710 = vmatpush1.msra.mxu0 %v1631
      %1711 = vmatprep.subr.mxu0 %v1630
      %1712 = vmatpush1.msra.mxu0 %v1629
      %1713 = vmatprep.subr.mxu0 0.0
      %1714 = vmatpush2.msra.mxu0 0.0
      %1715 = vmatprep.subr.mxu0 0.0
      %1716 = vmatpush2.msra.mxu0 0.0
      %1717 = vmatprep.subr.mxu0 0.0
      %1718 = vmatpush2.msra.mxu0 0.0
      %1719 = vmatprep.subr.mxu0 0.0
      %1720 = vmatpush2.msra.mxu0 0.0
      %1721 = vmatprep.subr.mxu0 0.0
      %1722 = vmatpush2.msra.mxu0 0.0
      %1723 = vmatprep.subr.mxu0 0.0
      %1724 = vmatpush2.msra.mxu0 0.0
      %1725 = vmatprep.subr.mxu0 0.0
      %1726 = vmatpush2.msra.mxu0 0.0
      %1727 = vmatprep.subr.mxu0 0.0
      %1728 = vmatpush2.msra.mxu0 0.0
      %1729 = vmatprep.subr.mxu0 %v1676
      %1730 = vmatpush2.msra.mxu0 %v1675
      %1731 = vmatprep.subr.mxu0 %v1674
      %1732 = vmatpush2.msra.mxu0 %v1673
      %1733 = vmatprep.subr.mxu0 %v1672
      %1734 = vmatpush2.msra.mxu0 %v1671
      %1735 = vmatprep.subr.mxu0 %v1670
      %1736 = vmatpush2.msra.mxu0 %v1669
      %1737 = vmatprep.subr.mxu0 %v1668
      %1738 = vmatpush2.msra.mxu0 %v1667
      %1739 = vmatprep.subr.mxu0 %v1666
      %1740 = vmatpush2.msra.mxu0 %v1665
      %1741 = vmatprep.subr.mxu0 %v1664
      %1742 = vmatpush2.msra.mxu0 %v1663
      %1743 = vmatprep.subr.mxu0 %v1662
      %1744 = vmatpush2.msra.mxu0 %v1661
      %1745 = vmatprep.mubr.f32.mxu0 %v1679
      %1746 = vmatmul.mubr.f32.gmra.mxu0 %v1627
      %v1747 = vpop.f32.mrf.mxu0
      %v1748 = vadd.f32 0.0, %v1747
      %v1749 = vpop.f32.mrf.mxu0
      %v1750 = vadd.f32 0.0, %v1749
      %1751 = vdwg.mxu0
      %v1752 = vadd.f32 %v1748, %v1750
      %1753 = vadd.xlane.f32.xlu0 %v1752
      %v1754 = vpop.xlane.xlu0 %1753
      %v1755 = vmul.f32 %v1748, %v1748
      %v1756 = vmul.f32 %v1750, %v1750
      %v1757 = vadd.f32 %v1755, %v1756
      %1758 = vadd.xlane.f32.xlu0 %v1757
      %v1759 = vpop.xlane.xlu0 %1758
      %v1760 = vmul.f32 %v1754, 0.00390625
      %v1761 = vmul.f32 %v1759, 0.00390625
      %v1762 = vmul.f32 %v1760, %v1760
      %v1763 = vsub.f32 %v1761, %v1762
      %v1764 = vmax.f32 %v1763, 0.0
      %v1765 = vsub.f32 %v1748, %v1760
      %v1766 = vsub.f32 %v1750, %v1760
      %v1767 = vadd.f32 %v1764, 1e-05
      %v1768 = vrsqrt.pop %v1767
      %v1769 = vmul.f32 %v1765, %v1768
      %v1770 = vmul.f32 %v1766, %v1768
      %vm1771 = vcmp.gt.f32.partialorder %v1769, 0.0
      %vm1772 = vcmp.gt.f32.partialorder %v1770, 0.0
      %s1773 = scalar_lea.vmem %s2, 24
      %v1774 = vld [vmem:[%s1773] sm:$0xff]
      %1776 = vset.pattern.permute.xlu0 0
      %1777 = vperm.xlu0 %1776, %v1774
      %v1778 = vpop.permute.xlu0 %1777
      %v1780 = vmul.f32 %v1778, %v1769
      %v1781 = vmul.f32 %v1778, %v1770
      %v1782 = vsel %vm1771, %v1769, %v1780
      %v1783 = vsel %vm1772, %v1770, %v1781
      %1784 = vst [vmem:[%s197] sm:$0xff] %v1782
      %1785 = vst [vmem:[%s197 + $0x8] sm:$0xff] %v1783
      %p1786 = scmp.lt.s32.totalorder %s15, 1
      %s1787 = scalar_select %p1786, %s15, 1
      %s1788 = smul.addr %s1787, 2
      %s1789 = smul.addr %s1788, 8
      %s1790 = scalar_lea.vmem %s4, %s1789
      // Predicated region
      $region37: #{densenet_pallas.1} parent=35 // pred_check
        %p1791 = pneg %p122
      $region38: #{densenet_pallas.1} parent=35 // pred_check_branch
        %1793 = sbr.rel (%p1791) target = $region40
      $region39: #{densenet_pallas.1} parent=35 // pred_region
        _
      $region40: #{densenet_pallas.1} parent=35 // pred_fallthru
        _
    $region36: #{densenet_pallas.1} parent=5 // pred_fallthru
      _
    %p1794 = scmp.le.s32.totalorder 2, %s10
    // Predicated region
    $region41: #{densenet_pallas.1} parent=5 // pred_check
      %p1795 = pneg %p1794
    $region42: #{densenet_pallas.1} parent=5 // pred_check_branch
      %1797 = sbr.rel (%p1795) target = $region44
    $region43: #{densenet_pallas.1} parent=5 // pred_region
      %s1798 = ssub.s32 %s10, 2
      // Predicated region
      $region45: #{densenet_pallas.1} parent=43 // pred_check
        %p1799 = pneg %p128
      $region46: #{densenet_pallas.1} parent=43 // pred_check_branch
        %1801 = sbr.rel (%p1799) target = $region48
      $region47: #{densenet_pallas.1} parent=43 // pred_region
        %p1802 = scmp.lt.s32.totalorder %s16, 1
        %s1803 = scalar_select %p1802, %s16, 1
        %s1804 = smul.addr %s1803, 2
        %s1805 = smul.addr %s1804, 8
        %s1806 = scalar_lea.vmem %s4, %s1805
      $region48: #{densenet_pallas.1} parent=43 // pred_fallthru
        _
    $region44: #{densenet_pallas.1} parent=5 // pred_fallthru
      _
  $region6: #{densenet_pallas.1} parent=0 // loop_footer
    %s14 = sadd.s32 1, %s10
  $region7: #{densenet_pallas.1} parent=0 // loop_footer_branch
    %9 = sbr.rel target = $region3
  $region8: #{densenet_pallas.1} parent=0 // loop_exit
    _

</llo_original>
